<compile_context>
chip_gen: v7x
topology: tpu7x:2x2x1
jax: 0.10.0
libtpu: 0.0.40
codegen_flags: <defaults>
</compile_context>

<pallas_src>
import functools

import numpy as np
import jax
import jax.numpy as jnp
from jax.experimental import pallas as pl
from jax.experimental.pallas import tpu as pltpu

EPS = 1e-5


def _layernorm(y):
    # torch.nn.LayerNorm(E) at default init (weight=1, bias=0), eps=1e-5.
    mean = jnp.mean(y, axis=-1, keepdims=True)
    var = jnp.mean((y - mean) ** 2, axis=-1, keepdims=True)
    return (y - mean) * jax.lax.rsqrt(var + EPS)


def _mha_block(x_q, x_kv, bias, w_q, w_kv, w_o, *, n_heads, k_dim, v_dim, mxu_dtype):
    """Multi-head attention on resident VMEM values for ONE batch element.

    x_q  : (Lq, E) f32   query-side activations (also the residual)
    x_kv : (Lk, E) f32   key/value-side activations
    bias : (Lq, Lk) f32  additive attention bias (0 or -1e9)
    w_q  : (E, H*dk) or None  (None => w_kv is the fused self-attn QKV weight)
    w_kv : (E, H*(dk+dv))  or (E, H*(2dk+dv)) when w_q is None
    w_o  : (H*dv, E)
    Heads are fused into the matmul N/K dims; only scores/ctx are head-batched.
    """
    H, dk, dv = n_heads, k_dim, v_dim
    Hdk = H * dk

    xkv_m = x_kv.astype(mxu_dtype)
    if w_q is None:
        # Self-attention: one fused QKV projection matmul, N = H*(2dk+dv).
        qkv = jnp.dot(xkv_m, w_kv, preferred_element_type=jnp.float32)
        q_f, k_f, v_f = qkv[:, :Hdk], qkv[:, Hdk:2 * Hdk], qkv[:, 2 * Hdk:]
    else:
        # Cross-attention: Q from decoder state, fused K/V from encoder outputs.
        q_f = jnp.dot(x_q.astype(mxu_dtype), w_q, preferred_element_type=jnp.float32)
        kv = jnp.dot(xkv_m, w_kv, preferred_element_type=jnp.float32)
        k_f, v_f = kv[:, :Hdk], kv[:, Hdk:]

    # Heads -> leading batch dim (layout plumbing only: static lane slices +
    # leading-dim stack; the matmuls above/below stay fused over heads).
    q = jnp.stack([q_f[:, h * dk:(h + 1) * dk] for h in range(H)], axis=0).astype(mxu_dtype)
    k = jnp.stack([k_f[:, h * dk:(h + 1) * dk] for h in range(H)], axis=0).astype(mxu_dtype)
    v = jnp.stack([v_f[:, h * dv:(h + 1) * dv] for h in range(H)], axis=0).astype(mxu_dtype)

    scale = np.float32(1.0 / np.sqrt(dk))
    scores = jnp.einsum('hqd,hkd->hqk', q, k,
                        preferred_element_type=jnp.float32) * scale      # (H, Lq, Lk) f32
    scores = scores + bias[None, :, :]                                   # mask as single add

    # Numerically stable softmax in f32; divide pushed onto the EUP slot.
    m = jnp.max(scores, axis=-1, keepdims=True)
    e = jnp.exp(scores - m)
    s = jnp.sum(e, axis=-1, keepdims=True)
    p = (e * pl.reciprocal(s, approx=True)).astype(mxu_dtype)

    ctx = jnp.einsum('hqk,hkd->hqd', p, v,
                     preferred_element_type=jnp.float32)                 # (H, Lq, dv) f32
    ctx_cat = jnp.concatenate([ctx[h] for h in range(H)], axis=-1)       # (Lq, H*dv)
    proj = jnp.dot(ctx_cat.astype(mxu_dtype), w_o,
                   preferred_element_type=jnp.float32)                   # (Lq, E)
    return _layernorm(proj + x_q)


def _decoder_layer_kernel(x_ref, enc_ref, sbias_ref, cbias_ref,
                          w_sa_qkv_ref, w_sa_o_ref,
                          w_ca_q_ref, w_ca_kv_ref, w_ca_o_ref,
                          w_ff1_ref, w_ff2_ref, out_ref,
                          *, n_heads, k_dim, v_dim, mxu_dtype):
    x = x_ref[0]        # (Ld, E) f32 -- this grid step's batch element
    enc = enc_ref[0]    # (Le, E) f32

    # Stage 1: masked self-attention + residual + LayerNorm
    out1 = _mha_block(x, x, sbias_ref[0], None, w_sa_qkv_ref[...], w_sa_o_ref[...],
                      n_heads=n_heads, k_dim=k_dim, v_dim=v_dim, mxu_dtype=mxu_dtype)

    # Stage 2: decoder-encoder attention + residual + LayerNorm
    out2 = _mha_block(out1, enc, cbias_ref[0], w_ca_q_ref[...], w_ca_kv_ref[...],
                      w_ca_o_ref[...],
                      n_heads=n_heads, k_dim=k_dim, v_dim=v_dim, mxu_dtype=mxu_dtype)

    # Stage 3: feed-forward + residual + LayerNorm
    h = jnp.maximum(jnp.dot(out2.astype(mxu_dtype), w_ff1_ref[...],
                            preferred_element_type=jnp.float32), 0.0)
    y = jnp.dot(h.astype(mxu_dtype), w_ff2_ref[...],
                preferred_element_type=jnp.float32)
    out_ref[...] = _layernorm(y + out2).astype(out_ref.dtype)


def decoder_layer(params, decoder_inputs, encoder_outputs,
                  self_attn_mask, dec_enc_attn_mask, *,
                  n_heads, k_dim, v_dim, mxu_dtype=jnp.bfloat16):
    B, Ld, E = decoder_inputs.shape
    Le = encoder_outputs.shape[1]
    H, dk, dv = n_heads, k_dim, v_dim
    sa, da, ff = params["self_attn"], params["dec_enc_attn"], params["ffn"]

    # One-time host-side weight packing: heads fused along the output axis so
    # the kernel does single lane-dense projection matmuls instead of per-head ones.
    w_sa_qkv = jnp.concatenate([sa["wq"], sa["wk"], sa["wv"]], axis=1).astype(mxu_dtype)
    w_sa_o = sa["wo"].astype(mxu_dtype)                          # (H*dv, E)
    w_ca_q = da["wq"].astype(mxu_dtype)                          # (E, H*dk)
    w_ca_kv = jnp.concatenate([da["wk"], da["wv"]], axis=1).astype(mxu_dtype)
    w_ca_o = da["wo"].astype(mxu_dtype)                          # (H*dv, E)
    w_ff1 = ff["w1"].astype(mxu_dtype)
    w_ff2 = ff["w2"].astype(mxu_dtype)

    # Masks -> f32 additive biases; in-kernel masking becomes a single add.
    sbias = jnp.where(self_attn_mask != 0, -1e9, 0.0).astype(jnp.float32)
    cbias = jnp.where(dec_enc_attn_mask != 0, -1e9, 0.0).astype(jnp.float32)

    kernel = functools.partial(_decoder_layer_kernel, n_heads=H, k_dim=dk,
                               v_dim=dv, mxu_dtype=mxu_dtype)

    def resident(w):
        # Full-shape block, constant block index: DMA'd into VMEM once and not
        # re-streamed across grid steps.
        return pl.BlockSpec(w.shape, lambda b, _nd=w.ndim: (0,) * _nd)

    out2d = pl.pallas_call(
        kernel,
        out_shape=jax.ShapeDtypeStruct((B * Ld, E), decoder_inputs.dtype),
        grid=(B,),
        in_specs=[
            pl.BlockSpec((1, Ld, E), lambda b: (b, 0, 0)),       # decoder inputs
            pl.BlockSpec((1, Le, E), lambda b: (b, 0, 0)),       # encoder outputs
            pl.BlockSpec((1, Ld, Ld), lambda b: (b, 0, 0)),      # self-attn bias
            pl.BlockSpec((1, Ld, Le), lambda b: (b, 0, 0)),      # dec-enc bias
            resident(w_sa_qkv), resident(w_sa_o),
            resident(w_ca_q), resident(w_ca_kv), resident(w_ca_o),
            resident(w_ff1), resident(w_ff2),
        ],
        out_specs=pl.BlockSpec((Ld, E), lambda b: (b, 0)),
        compiler_params=pltpu.CompilerParams(
            dimension_semantics=("parallel",),        # v7x: use both TensorCores
            vmem_limit_bytes=32 * 1024 * 1024),
    )(decoder_inputs, encoder_outputs, sbias, cbias,
      w_sa_qkv, w_sa_o, w_ca_q, w_ca_kv, w_ca_o, w_ff1, w_ff2)

    return out2d.reshape(B, Ld, E)


# ---------------------------------------------------------------------------
# Pure-JAX reference (mirrors the PyTorch forward) for the correctness check.
# ---------------------------------------------------------------------------
def _ref_mha(x_q, x_kv, mask, wq, wk, wv, wo, n_heads, k_dim, v_dim):
    B, Lq, E = x_q.shape
    Lk = x_kv.shape[1]
    Q = (x_q @ wq).reshape(B, Lq, n_heads, k_dim).transpose(0, 2, 1, 3)
    K = (x_kv @ wk).reshape(B, Lk, n_heads, k_dim).transpose(0, 2, 1, 3)
    V = (x_kv @ wv).reshape(B, Lk, n_heads, v_dim).transpose(0, 2, 1, 3)
    scores = jnp.einsum("bhqd,bhkd->bhqk", Q, K) / np.sqrt(k_dim)
    scores = jnp.where(mask[:, None, :, :] != 0, -1e9, scores)
    w = jax.nn.softmax(scores, axis=-1)
    ctx = jnp.einsum("bhqk,bhkd->bhqd", w, V).transpose(0, 2, 1, 3).reshape(
        B, Lq, n_heads * v_dim)
    out = ctx @ wo + x_q
    return _layernorm(out)


def _ref_decoder_layer(params, x, enc, m1, m2, n_heads, k_dim, v_dim):
    sa, da, ff = params["self_attn"], params["dec_enc_attn"], params["ffn"]
    o = _ref_mha(x, x, m1, sa["wq"], sa["wk"], sa["wv"], sa["wo"], n_heads, k_dim, v_dim)
    o = _ref_mha(o, enc, m2, da["wq"], da["wk"], da["wv"], da["wo"], n_heads, k_dim, v_dim)
    h = jnp.maximum(o @ ff["w1"], 0.0)
    return _layernorm(h @ ff["w2"] + o)


def init_params(key, embedding_size, k_dim, v_dim, n_heads, hidden_size):
    ks = jax.random.split(key, 10)

    def lin(k, fan_in, fan_out):
        bound = 1.0 / np.sqrt(fan_in)
        return jax.random.uniform(k, (fan_in, fan_out), jnp.float32, -bound, bound)

    def mha(k4):
        return dict(
            wq=lin(k4[0], embedding_size, k_dim * n_heads),
            wk=lin(k4[1], embedding_size, k_dim * n_heads),
            wv=lin(k4[2], embedding_size, v_dim * n_heads),
            wo=lin(k4[3], n_heads * v_dim, embedding_size),
        )

    return dict(
        self_attn=mha(ks[0:4]),
        dec_enc_attn=mha(ks[4:8]),
        ffn=dict(
            w1=lin(ks[8], embedding_size, hidden_size),
            w2=lin(ks[9], hidden_size, embedding_size),
        ),
    )


if __name__ == "__main__":
    # Small shapes consistent with the module's forward.
    B, Ld, Le = 2, 8, 16
    E, k_dim, v_dim, n_heads, hidden = 32, 8, 8, 2, 64

    key = jax.random.PRNGKey(0)
    k_p, k_x, k_e = jax.random.split(key, 3)
    params = init_params(k_p, E, k_dim, v_dim, n_heads, hidden)

    decoder_inputs = jax.random.normal(k_x, (B, Ld, E), jnp.float32)
    encoder_outputs = jax.random.normal(k_e, (B, Le, E), jnp.float32)

    # Causal mask for self-attention (1 = masked), no masking for dec-enc attn.
    self_mask = jnp.triu(jnp.ones((Ld, Ld), jnp.int32), k=1)[None].repeat(B, axis=0)
    dec_enc_mask = jnp.zeros((B, Ld, Le), jnp.int32)

    ref = _ref_decoder_layer(params, decoder_inputs, encoder_outputs,
                             self_mask, dec_enc_mask, n_heads, k_dim, v_dim)

    # Exact-parity path: f32 MXU operands (matches the PyTorch module closely).
    out_f32 = jax.block_until_ready(
        decoder_layer(params, decoder_inputs, encoder_outputs, self_mask,
                      dec_enc_mask, n_heads=n_heads, k_dim=k_dim, v_dim=v_dim,
                      mxu_dtype=jnp.float32))
    np.testing.assert_allclose(np.asarray(out_f32), np.asarray(ref),
                               atol=2e-3, rtol=2e-3)

    # Default mixed-precision path (bf16 MXU operands, f32 accumulation/VPU math).
    out_bf16 = jax.block_until_ready(
        decoder_layer(params, decoder_inputs, encoder_outputs, self_mask,
                      dec_enc_mask, n_heads=n_heads, k_dim=k_dim, v_dim=v_dim))
    np.testing.assert_allclose(np.asarray(out_bf16), np.asarray(ref),
                               atol=1e-1, rtol=1e-1)

    print("KERNEL_OK")
</pallas_src>

<mosaic_0001>
module attributes {stable_mosaic.version = 11 : i64} {
  func.func @_decoder_layer_kernel(%arg0: i32, %arg1: memref<1x8x32xf32, #tpu.memory_space<vmem>>, %arg2: memref<1x16x32xf32, #tpu.memory_space<vmem>>, %arg3: memref<1x8x8xf32, #tpu.memory_space<vmem>>, %arg4: memref<1x8x16xf32, #tpu.memory_space<vmem>>, %arg5: memref<32x48xf32, #tpu.memory_space<vmem>>, %arg6: memref<16x32xf32, #tpu.memory_space<vmem>>, %arg7: memref<32x16xf32, #tpu.memory_space<vmem>>, %arg8: memref<32x32xf32, #tpu.memory_space<vmem>>, %arg9: memref<16x32xf32, #tpu.memory_space<vmem>>, %arg10: memref<32x64xf32, #tpu.memory_space<vmem>>, %arg11: memref<64x32xf32, #tpu.memory_space<vmem>>, %arg12: memref<8x32xf32, #tpu.memory_space<vmem>>) attributes {dimension_semantics = [#tpu.dimension_semantics<parallel>], iteration_bounds = array<i64: 2>, scalar_prefetch = 0 : i64, scratch_operands = 0 : i64, tpu.core_type = #tpu.core_type<tc>, window_params = [{transform_indices = @transform_0, window_bounds = array<i64: 1, 8, 32>}, {transform_indices = @transform_1, window_bounds = array<i64: 1, 16, 32>}, {transform_indices = @transform_2, window_bounds = array<i64: 1, 8, 8>}, {transform_indices = @transform_3, window_bounds = array<i64: 1, 8, 16>}, {pipeline_mode = #tpu.pipeline_mode<synchronous>, transform_indices = @transform_4, window_bounds = array<i64: 32, 48>}, {pipeline_mode = #tpu.pipeline_mode<synchronous>, transform_indices = @transform_5, window_bounds = array<i64: 16, 32>}, {pipeline_mode = #tpu.pipeline_mode<synchronous>, transform_indices = @transform_6, window_bounds = array<i64: 32, 16>}, {pipeline_mode = #tpu.pipeline_mode<synchronous>, transform_indices = @transform_7, window_bounds = array<i64: 32, 32>}, {pipeline_mode = #tpu.pipeline_mode<synchronous>, transform_indices = @transform_8, window_bounds = array<i64: 16, 32>}, {pipeline_mode = #tpu.pipeline_mode<synchronous>, transform_indices = @transform_9, window_bounds = array<i64: 32, 64>}, {pipeline_mode = #tpu.pipeline_mode<synchronous>, transform_indices = @transform_10, window_bounds = array<i64: 64, 32>}, {transform_indices = @transform_11, window_bounds = array<i64: 8, 32>}]} {
    %c0 = arith.constant 0 : index
    %c0_0 = arith.constant 0 : index
    %c0_1 = arith.constant 0 : index
    %0 = vector.load %arg1[%c0, %c0_0, %c0_1] : memref<1x8x32xf32, #tpu.memory_space<vmem>>, vector<1x8x32xf32>
    %1 = vector.shape_cast %0 : vector<1x8x32xf32> to vector<8x32xf32>
    %c0_2 = arith.constant 0 : index
    %c0_3 = arith.constant 0 : index
    %c0_4 = arith.constant 0 : index
    %2 = vector.load %arg2[%c0_2, %c0_3, %c0_4] : memref<1x16x32xf32, #tpu.memory_space<vmem>>, vector<1x16x32xf32>
    %3 = vector.shape_cast %2 : vector<1x16x32xf32> to vector<16x32xf32>
    %c0_5 = arith.constant 0 : index
    %c0_6 = arith.constant 0 : index
    %c0_7 = arith.constant 0 : index
    %4 = vector.load %arg3[%c0_5, %c0_6, %c0_7] : memref<1x8x8xf32, #tpu.memory_space<vmem>>, vector<1x8x8xf32>
    %5 = vector.shape_cast %4 : vector<1x8x8xf32> to vector<8x8xf32>
    %c0_8 = arith.constant 0 : index
    %c0_9 = arith.constant 0 : index
    %6 = vector.load %arg5[%c0_8, %c0_9] : memref<32x48xf32, #tpu.memory_space<vmem>>, vector<32x48xf32>
    %c0_10 = arith.constant 0 : index
    %c0_11 = arith.constant 0 : index
    %7 = vector.load %arg6[%c0_10, %c0_11] : memref<16x32xf32, #tpu.memory_space<vmem>>, vector<16x32xf32>
    %cst = arith.constant dense<0.000000e+00> : vector<8x48xf32>
    %8 = tpu.matmul %1, %6, %cst {dimension_numbers = #tpu.dot_dimension_numbers<[1], [0], [0], [1], [0, 0, 1, 1], [], []>} : vector<8x32xf32>, vector<32x48xf32>, vector<8x48xf32> -> vector<8x48xf32>
    %9 = vector.extract_strided_slice %8 {offsets = [0, 0], sizes = [8, 16], strides = [1, 1]} : vector<8x48xf32> to vector<8x16xf32>
    %10 = vector.extract_strided_slice %8 {offsets = [0, 16], sizes = [8, 16], strides = [1, 1]} : vector<8x48xf32> to vector<8x16xf32>
    %11 = vector.extract_strided_slice %8 {offsets = [0, 32], sizes = [8, 16], strides = [1, 1]} : vector<8x48xf32> to vector<8x16xf32>
    %12 = vector.extract_strided_slice %9 {offsets = [0, 0], sizes = [8, 8], strides = [1, 1]} : vector<8x16xf32> to vector<8x8xf32>
    %13 = vector.extract_strided_slice %9 {offsets = [0, 8], sizes = [8, 8], strides = [1, 1]} : vector<8x16xf32> to vector<8x8xf32>
    %14 = vector.shape_cast %12 : vector<8x8xf32> to vector<1x8x8xf32>
    %15 = vector.shape_cast %13 : vector<8x8xf32> to vector<1x8x8xf32>
    %16 = tpu.concatenate %14, %15 in 0 : vector<1x8x8xf32>, vector<1x8x8xf32> -> vector<2x8x8xf32>
    %17 = vector.extract_strided_slice %10 {offsets = [0, 0], sizes = [8, 8], strides = [1, 1]} : vector<8x16xf32> to vector<8x8xf32>
    %18 = vector.extract_strided_slice %10 {offsets = [0, 8], sizes = [8, 8], strides = [1, 1]} : vector<8x16xf32> to vector<8x8xf32>
    %19 = vector.shape_cast %17 : vector<8x8xf32> to vector<1x8x8xf32>
    %20 = vector.shape_cast %18 : vector<8x8xf32> to vector<1x8x8xf32>
    %21 = tpu.concatenate %19, %20 in 0 : vector<1x8x8xf32>, vector<1x8x8xf32> -> vector<2x8x8xf32>
    %22 = vector.extract_strided_slice %11 {offsets = [0, 0], sizes = [8, 8], strides = [1, 1]} : vector<8x16xf32> to vector<8x8xf32>
    %23 = vector.extract_strided_slice %11 {offsets = [0, 8], sizes = [8, 8], strides = [1, 1]} : vector<8x16xf32> to vector<8x8xf32>
    %24 = vector.shape_cast %22 : vector<8x8xf32> to vector<1x8x8xf32>
    %25 = vector.shape_cast %23 : vector<8x8xf32> to vector<1x8x8xf32>
    %26 = tpu.concatenate %24, %25 in 0 : vector<1x8x8xf32>, vector<1x8x8xf32> -> vector<2x8x8xf32>
    "tpu.trace_start"() <{level = 10 : i32, message = "hqd,hkd->hqk"}> : () -> ()
    %cst_12 = arith.constant dense<0.000000e+00> : vector<2x8x8xf32>
    %27 = tpu.matmul %16, %21, %cst_12 {dimension_numbers = #tpu.dot_dimension_numbers<[2], [2], [1], [1], [0, 0, 0, 1, 1, 1], [0], [0]>} : vector<2x8x8xf32>, vector<2x8x8xf32>, vector<2x8x8xf32> -> vector<2x8x8xf32>
    "tpu.trace_stop"() : () -> ()
    %cst_13 = arith.constant 0.353553385 : f32
    %28 = vector.broadcast %cst_13 : f32 to vector<2x8x8xf32>
    %29 = arith.mulf %27, %28 : vector<2x8x8xf32>
    %30 = vector.shape_cast %5 : vector<8x8xf32> to vector<1x8x8xf32>
    %31 = vector.broadcast %30 : vector<1x8x8xf32> to vector<2x8x8xf32>
    %32 = arith.addf %29, %31 : vector<2x8x8xf32>
    %cst_14 = arith.constant dense<0xFF800000> : vector<2x8xf32>
    %33 = vector.multi_reduction <maximumf>, %32, %cst_14 [2] : vector<2x8x8xf32> to vector<2x8xf32>
    %34 = vector.shape_cast %33 : vector<2x8xf32> to vector<2x8x1xf32>
    %35 = vector.broadcast %34 : vector<2x8x1xf32> to vector<2x8x8xf32>
    %36 = arith.subf %32, %35 : vector<2x8x8xf32>
    %37 = math.exp %36 : vector<2x8x8xf32>
    %cst_15 = arith.constant dense<0.000000e+00> : vector<2x8xf32>
    %38 = vector.multi_reduction <add>, %37, %cst_15 [2] : vector<2x8x8xf32> to vector<2x8xf32>
    %39 = vector.shape_cast %38 : vector<2x8xf32> to vector<2x8x1xf32>
    %40 = tpu.reciprocal %39 {approx = true} : vector<2x8x1xf32> -> vector<2x8x1xf32>
    %41 = vector.broadcast %40 : vector<2x8x1xf32> to vector<2x8x8xf32>
    %42 = arith.mulf %37, %41 : vector<2x8x8xf32>
    "tpu.trace_start"() <{level = 10 : i32, message = "hqk,hkd->hqd"}> : () -> ()
    %cst_16 = arith.constant dense<0.000000e+00> : vector<2x8x8xf32>
    %43 = tpu.matmul %42, %26, %cst_16 {dimension_numbers = #tpu.dot_dimension_numbers<[2], [1], [1], [2], [0, 0, 0, 1, 1, 2], [0], [0]>} : vector<2x8x8xf32>, vector<2x8x8xf32>, vector<2x8x8xf32> -> vector<2x8x8xf32>
    "tpu.trace_stop"() : () -> ()
    %44 = vector.extract_strided_slice %43 {offsets = [0, 0, 0], sizes = [1, 8, 8], strides = [1, 1, 1]} : vector<2x8x8xf32> to vector<1x8x8xf32>
    %45 = vector.shape_cast %44 : vector<1x8x8xf32> to vector<8x8xf32>
    %46 = vector.extract_strided_slice %43 {offsets = [1, 0, 0], sizes = [1, 8, 8], strides = [1, 1, 1]} : vector<2x8x8xf32> to vector<1x8x8xf32>
    %47 = vector.shape_cast %46 : vector<1x8x8xf32> to vector<8x8xf32>
    %48 = tpu.concatenate %45, %47 in 1 : vector<8x8xf32>, vector<8x8xf32> -> vector<8x16xf32>
    %cst_17 = arith.constant dense<0.000000e+00> : vector<8x32xf32>
    %49 = tpu.matmul %48, %7, %cst_17 {dimension_numbers = #tpu.dot_dimension_numbers<[1], [0], [0], [1], [0, 0, 1, 1], [], []>} : vector<8x16xf32>, vector<16x32xf32>, vector<8x32xf32> -> vector<8x32xf32>
    %50 = arith.addf %49, %1 : vector<8x32xf32>
    %cst_18 = arith.constant dense<0.000000e+00> : vector<8xf32>
    %51 = vector.multi_reduction <add>, %50, %cst_18 [1] : vector<8x32xf32> to vector<8xf32>
    %52 = vector.shape_cast %51 : vector<8xf32> to vector<8x1xf32>
    %cst_19 = arith.constant 3.200000e+01 : f32
    %53 = vector.broadcast %cst_19 : f32 to vector<8x1xf32>
    %54 = arith.divf %52, %53 : vector<8x1xf32>
    %55 = vector.broadcast %54 : vector<8x1xf32> to vector<8x32xf32>
    %56 = arith.subf %50, %55 : vector<8x32xf32>
    %57 = arith.mulf %56, %56 : vector<8x32xf32>
    %cst_20 = arith.constant dense<0.000000e+00> : vector<8xf32>
    %58 = vector.multi_reduction <add>, %57, %cst_20 [1] : vector<8x32xf32> to vector<8xf32>
    %59 = vector.shape_cast %58 : vector<8xf32> to vector<8x1xf32>
    %cst_21 = arith.constant 3.200000e+01 : f32
    %60 = vector.broadcast %cst_21 : f32 to vector<8x1xf32>
    %61 = arith.divf %59, %60 : vector<8x1xf32>
    %62 = vector.broadcast %54 : vector<8x1xf32> to vector<8x32xf32>
    %63 = arith.subf %50, %62 : vector<8x32xf32>
    %cst_22 = arith.constant 9.99999974E-6 : f32
    %64 = vector.broadcast %cst_22 : f32 to vector<8x1xf32>
    %65 = arith.addf %61, %64 : vector<8x1xf32>
    %66 = math.rsqrt %65 : vector<8x1xf32>
    %67 = vector.broadcast %66 : vector<8x1xf32> to vector<8x32xf32>
    %68 = arith.mulf %63, %67 : vector<8x32xf32>
    %c0_23 = arith.constant 0 : index
    %c0_24 = arith.constant 0 : index
    %c0_25 = arith.constant 0 : index
    %69 = vector.load %arg4[%c0_23, %c0_24, %c0_25] : memref<1x8x16xf32, #tpu.memory_space<vmem>>, vector<1x8x16xf32>
    %70 = vector.shape_cast %69 : vector<1x8x16xf32> to vector<8x16xf32>
    %c0_26 = arith.constant 0 : index
    %c0_27 = arith.constant 0 : index
    %71 = vector.load %arg7[%c0_26, %c0_27] : memref<32x16xf32, #tpu.memory_space<vmem>>, vector<32x16xf32>
    %c0_28 = arith.constant 0 : index
    %c0_29 = arith.constant 0 : index
    %72 = vector.load %arg8[%c0_28, %c0_29] : memref<32x32xf32, #tpu.memory_space<vmem>>, vector<32x32xf32>
    %c0_30 = arith.constant 0 : index
    %c0_31 = arith.constant 0 : index
    %73 = vector.load %arg9[%c0_30, %c0_31] : memref<16x32xf32, #tpu.memory_space<vmem>>, vector<16x32xf32>
    %cst_32 = arith.constant dense<0.000000e+00> : vector<8x16xf32>
    %74 = tpu.matmul %68, %71, %cst_32 {dimension_numbers = #tpu.dot_dimension_numbers<[1], [0], [0], [1], [0, 0, 1, 1], [], []>} : vector<8x32xf32>, vector<32x16xf32>, vector<8x16xf32> -> vector<8x16xf32>
    %cst_33 = arith.constant dense<0.000000e+00> : vector<16x32xf32>
    %75 = tpu.matmul %3, %72, %cst_33 {dimension_numbers = #tpu.dot_dimension_numbers<[1], [0], [0], [1], [0, 0, 1, 1], [], []>} : vector<16x32xf32>, vector<32x32xf32>, vector<16x32xf32> -> vector<16x32xf32>
    %76 = vector.extract_strided_slice %75 {offsets = [0, 0], sizes = [16, 16], strides = [1, 1]} : vector<16x32xf32> to vector<16x16xf32>
    %77 = vector.extract_strided_slice %75 {offsets = [0, 16], sizes = [16, 16], strides = [1, 1]} : vector<16x32xf32> to vector<16x16xf32>
    %78 = vector.extract_strided_slice %74 {offsets = [0, 0], sizes = [8, 8], strides = [1, 1]} : vector<8x16xf32> to vector<8x8xf32>
    %79 = vector.extract_strided_slice %74 {offsets = [0, 8], sizes = [8, 8], strides = [1, 1]} : vector<8x16xf32> to vector<8x8xf32>
    %80 = vector.shape_cast %78 : vector<8x8xf32> to vector<1x8x8xf32>
    %81 = vector.shape_cast %79 : vector<8x8xf32> to vector<1x8x8xf32>
    %82 = tpu.concatenate %80, %81 in 0 : vector<1x8x8xf32>, vector<1x8x8xf32> -> vector<2x8x8xf32>
    %83 = vector.extract_strided_slice %76 {offsets = [0, 0], sizes = [16, 8], strides = [1, 1]} : vector<16x16xf32> to vector<16x8xf32>
    %84 = vector.extract_strided_slice %76 {offsets = [0, 8], sizes = [16, 8], strides = [1, 1]} : vector<16x16xf32> to vector<16x8xf32>
    %85 = vector.shape_cast %83 : vector<16x8xf32> to vector<1x16x8xf32>
    %86 = vector.shape_cast %84 : vector<16x8xf32> to vector<1x16x8xf32>
    %87 = tpu.concatenate %85, %86 in 0 : vector<1x16x8xf32>, vector<1x16x8xf32> -> vector<2x16x8xf32>
    %88 = vector.extract_strided_slice %77 {offsets = [0, 0], sizes = [16, 8], strides = [1, 1]} : vector<16x16xf32> to vector<16x8xf32>
    %89 = vector.extract_strided_slice %77 {offsets = [0, 8], sizes = [16, 8], strides = [1, 1]} : vector<16x16xf32> to vector<16x8xf32>
    %90 = vector.shape_cast %88 : vector<16x8xf32> to vector<1x16x8xf32>
    %91 = vector.shape_cast %89 : vector<16x8xf32> to vector<1x16x8xf32>
    %92 = tpu.concatenate %90, %91 in 0 : vector<1x16x8xf32>, vector<1x16x8xf32> -> vector<2x16x8xf32>
    "tpu.trace_start"() <{level = 10 : i32, message = "hqd,hkd->hqk"}> : () -> ()
    %cst_34 = arith.constant dense<0.000000e+00> : vector<2x8x16xf32>
    %93 = tpu.matmul %82, %87, %cst_34 {dimension_numbers = #tpu.dot_dimension_numbers<[2], [2], [1], [1], [0, 0, 0, 1, 1, 1], [0], [0]>} : vector<2x8x8xf32>, vector<2x16x8xf32>, vector<2x8x16xf32> -> vector<2x8x16xf32>
    "tpu.trace_stop"() : () -> ()
    %cst_35 = arith.constant 0.353553385 : f32
    %94 = vector.broadcast %cst_35 : f32 to vector<2x8x16xf32>
    %95 = arith.mulf %93, %94 : vector<2x8x16xf32>
    %96 = vector.shape_cast %70 : vector<8x16xf32> to vector<1x8x16xf32>
    %97 = vector.broadcast %96 : vector<1x8x16xf32> to vector<2x8x16xf32>
    %98 = arith.addf %95, %97 : vector<2x8x16xf32>
    %cst_36 = arith.constant dense<0xFF800000> : vector<2x8xf32>
    %99 = vector.multi_reduction <maximumf>, %98, %cst_36 [2] : vector<2x8x16xf32> to vector<2x8xf32>
    %100 = vector.shape_cast %99 : vector<2x8xf32> to vector<2x8x1xf32>
    %101 = vector.broadcast %100 : vector<2x8x1xf32> to vector<2x8x16xf32>
    %102 = arith.subf %98, %101 : vector<2x8x16xf32>
    %103 = math.exp %102 : vector<2x8x16xf32>
    %cst_37 = arith.constant dense<0.000000e+00> : vector<2x8xf32>
    %104 = vector.multi_reduction <add>, %103, %cst_37 [2] : vector<2x8x16xf32> to vector<2x8xf32>
    %105 = vector.shape_cast %104 : vector<2x8xf32> to vector<2x8x1xf32>
    %106 = tpu.reciprocal %105 {approx = true} : vector<2x8x1xf32> -> vector<2x8x1xf32>
    %107 = vector.broadcast %106 : vector<2x8x1xf32> to vector<2x8x16xf32>
    %108 = arith.mulf %103, %107 : vector<2x8x16xf32>
    "tpu.trace_start"() <{level = 10 : i32, message = "hqk,hkd->hqd"}> : () -> ()
    %cst_38 = arith.constant dense<0.000000e+00> : vector<2x8x8xf32>
    %109 = tpu.matmul %108, %92, %cst_38 {dimension_numbers = #tpu.dot_dimension_numbers<[2], [1], [1], [2], [0, 0, 0, 1, 1, 2], [0], [0]>} : vector<2x8x16xf32>, vector<2x16x8xf32>, vector<2x8x8xf32> -> vector<2x8x8xf32>
    "tpu.trace_stop"() : () -> ()
    %110 = vector.extract_strided_slice %109 {offsets = [0, 0, 0], sizes = [1, 8, 8], strides = [1, 1, 1]} : vector<2x8x8xf32> to vector<1x8x8xf32>
    %111 = vector.shape_cast %110 : vector<1x8x8xf32> to vector<8x8xf32>
    %112 = vector.extract_strided_slice %109 {offsets = [1, 0, 0], sizes = [1, 8, 8], strides = [1, 1, 1]} : vector<2x8x8xf32> to vector<1x8x8xf32>
    %113 = vector.shape_cast %112 : vector<1x8x8xf32> to vector<8x8xf32>
    %114 = tpu.concatenate %111, %113 in 1 : vector<8x8xf32>, vector<8x8xf32> -> vector<8x16xf32>
    %cst_39 = arith.constant dense<0.000000e+00> : vector<8x32xf32>
    %115 = tpu.matmul %114, %73, %cst_39 {dimension_numbers = #tpu.dot_dimension_numbers<[1], [0], [0], [1], [0, 0, 1, 1], [], []>} : vector<8x16xf32>, vector<16x32xf32>, vector<8x32xf32> -> vector<8x32xf32>
    %116 = arith.addf %115, %68 : vector<8x32xf32>
    %cst_40 = arith.constant dense<0.000000e+00> : vector<8xf32>
    %117 = vector.multi_reduction <add>, %116, %cst_40 [1] : vector<8x32xf32> to vector<8xf32>
    %118 = vector.shape_cast %117 : vector<8xf32> to vector<8x1xf32>
    %cst_41 = arith.constant 3.200000e+01 : f32
    %119 = vector.broadcast %cst_41 : f32 to vector<8x1xf32>
    %120 = arith.divf %118, %119 : vector<8x1xf32>
    %121 = vector.broadcast %120 : vector<8x1xf32> to vector<8x32xf32>
    %122 = arith.subf %116, %121 : vector<8x32xf32>
    %123 = arith.mulf %122, %122 : vector<8x32xf32>
    %cst_42 = arith.constant dense<0.000000e+00> : vector<8xf32>
    %124 = vector.multi_reduction <add>, %123, %cst_42 [1] : vector<8x32xf32> to vector<8xf32>
    %125 = vector.shape_cast %124 : vector<8xf32> to vector<8x1xf32>
    %cst_43 = arith.constant 3.200000e+01 : f32
    %126 = vector.broadcast %cst_43 : f32 to vector<8x1xf32>
    %127 = arith.divf %125, %126 : vector<8x1xf32>
    %128 = vector.broadcast %120 : vector<8x1xf32> to vector<8x32xf32>
    %129 = arith.subf %116, %128 : vector<8x32xf32>
    %cst_44 = arith.constant 9.99999974E-6 : f32
    %130 = vector.broadcast %cst_44 : f32 to vector<8x1xf32>
    %131 = arith.addf %127, %130 : vector<8x1xf32>
    %132 = math.rsqrt %131 : vector<8x1xf32>
    %133 = vector.broadcast %132 : vector<8x1xf32> to vector<8x32xf32>
    %134 = arith.mulf %129, %133 : vector<8x32xf32>
    %c0_45 = arith.constant 0 : index
    %c0_46 = arith.constant 0 : index
    %135 = vector.load %arg10[%c0_45, %c0_46] : memref<32x64xf32, #tpu.memory_space<vmem>>, vector<32x64xf32>
    %cst_47 = arith.constant dense<0.000000e+00> : vector<8x64xf32>
    %136 = tpu.matmul %134, %135, %cst_47 {dimension_numbers = #tpu.dot_dimension_numbers<[1], [0], [0], [1], [0, 0, 1, 1], [], []>} : vector<8x32xf32>, vector<32x64xf32>, vector<8x64xf32> -> vector<8x64xf32>
    %cst_48 = arith.constant 0.000000e+00 : f32
    %137 = vector.broadcast %cst_48 : f32 to vector<8x64xf32>
    %138 = arith.maximumf %136, %137 : vector<8x64xf32>
    %c0_49 = arith.constant 0 : index
    %c0_50 = arith.constant 0 : index
    %139 = vector.load %arg11[%c0_49, %c0_50] : memref<64x32xf32, #tpu.memory_space<vmem>>, vector<64x32xf32>
    %cst_51 = arith.constant dense<0.000000e+00> : vector<8x32xf32>
    %140 = tpu.matmul %138, %139, %cst_51 {dimension_numbers = #tpu.dot_dimension_numbers<[1], [0], [0], [1], [0, 0, 1, 1], [], []>} : vector<8x64xf32>, vector<64x32xf32>, vector<8x32xf32> -> vector<8x32xf32>
    %141 = arith.addf %140, %134 : vector<8x32xf32>
    %cst_52 = arith.constant dense<0.000000e+00> : vector<8xf32>
    %142 = vector.multi_reduction <add>, %141, %cst_52 [1] : vector<8x32xf32> to vector<8xf32>
    %143 = vector.shape_cast %142 : vector<8xf32> to vector<8x1xf32>
    %cst_53 = arith.constant 3.200000e+01 : f32
    %144 = vector.broadcast %cst_53 : f32 to vector<8x1xf32>
    %145 = arith.divf %143, %144 : vector<8x1xf32>
    %146 = vector.broadcast %145 : vector<8x1xf32> to vector<8x32xf32>
    %147 = arith.subf %141, %146 : vector<8x32xf32>
    %148 = arith.mulf %147, %147 : vector<8x32xf32>
    %cst_54 = arith.constant dense<0.000000e+00> : vector<8xf32>
    %149 = vector.multi_reduction <add>, %148, %cst_54 [1] : vector<8x32xf32> to vector<8xf32>
    %150 = vector.shape_cast %149 : vector<8xf32> to vector<8x1xf32>
    %cst_55 = arith.constant 3.200000e+01 : f32
    %151 = vector.broadcast %cst_55 : f32 to vector<8x1xf32>
    %152 = arith.divf %150, %151 : vector<8x1xf32>
    %153 = vector.broadcast %145 : vector<8x1xf32> to vector<8x32xf32>
    %154 = arith.subf %141, %153 : vector<8x32xf32>
    %cst_56 = arith.constant 9.99999974E-6 : f32
    %155 = vector.broadcast %cst_56 : f32 to vector<8x1xf32>
    %156 = arith.addf %152, %155 : vector<8x1xf32>
    %157 = math.rsqrt %156 : vector<8x1xf32>
    %158 = vector.broadcast %157 : vector<8x1xf32> to vector<8x32xf32>
    %159 = arith.mulf %154, %158 : vector<8x32xf32>
    %c0_57 = arith.constant 0 : index
    %c0_58 = arith.constant 0 : index
    %160 = vector.load %arg12[%c0_57, %c0_58] : memref<8x32xf32, #tpu.memory_space<vmem>>, vector<8x32xf32>
    tpu.vector_store %arg12[%c0_57, %c0_58], %159 {strides = array<i32>} : memref<8x32xf32, #tpu.memory_space<vmem>>, vector<8x32xf32>,
    return
  }
  func.func @transform_0(%arg0: i32) -> (i32, i32, i32) {
    %c0_i32 = arith.constant 0 : i32
    %c0_i32_0 = arith.constant 0 : i32
    %c0_i32_1 = arith.constant 0 : i32
    return %arg0, %c0_i32, %c0_i32_0 : i32, i32, i32
  }
  func.func @transform_1(%arg0: i32) -> (i32, i32, i32) {
    %c0_i32 = arith.constant 0 : i32
    %c0_i32_0 = arith.constant 0 : i32
    %c0_i32_1 = arith.constant 0 : i32
    return %arg0, %c0_i32, %c0_i32_0 : i32, i32, i32
  }
  func.func @transform_2(%arg0: i32) -> (i32, i32, i32) {
    %c0_i32 = arith.constant 0 : i32
    %c0_i32_0 = arith.constant 0 : i32
    %c0_i32_1 = arith.constant 0 : i32
    return %arg0, %c0_i32, %c0_i32_0 : i32, i32, i32
  }
  func.func @transform_3(%arg0: i32) -> (i32, i32, i32) {
    %c0_i32 = arith.constant 0 : i32
    %c0_i32_0 = arith.constant 0 : i32
    %c0_i32_1 = arith.constant 0 : i32
    return %arg0, %c0_i32, %c0_i32_0 : i32, i32, i32
  }
  func.func @transform_4(%arg0: i32) -> (i32, i32) {
    %c0_i32 = arith.constant 0 : i32
    %c0_i32_0 = arith.constant 0 : i32
    %c0_i32_1 = arith.constant 0 : i32
    return %c0_i32, %c0_i32_0 : i32, i32
  }
  func.func @transform_5(%arg0: i32) -> (i32, i32) {
    %c0_i32 = arith.constant 0 : i32
    %c0_i32_0 = arith.constant 0 : i32
    %c0_i32_1 = arith.constant 0 : i32
    return %c0_i32, %c0_i32_0 : i32, i32
  }
  func.func @transform_6(%arg0: i32) -> (i32, i32) {
    %c0_i32 = arith.constant 0 : i32
    %c0_i32_0 = arith.constant 0 : i32
    %c0_i32_1 = arith.constant 0 : i32
    return %c0_i32, %c0_i32_0 : i32, i32
  }
  func.func @transform_7(%arg0: i32) -> (i32, i32) {
    %c0_i32 = arith.constant 0 : i32
    %c0_i32_0 = arith.constant 0 : i32
    %c0_i32_1 = arith.constant 0 : i32
    return %c0_i32, %c0_i32_0 : i32, i32
  }
  func.func @transform_8(%arg0: i32) -> (i32, i32) {
    %c0_i32 = arith.constant 0 : i32
    %c0_i32_0 = arith.constant 0 : i32
    %c0_i32_1 = arith.constant 0 : i32
    return %c0_i32, %c0_i32_0 : i32, i32
  }
  func.func @transform_9(%arg0: i32) -> (i32, i32) {
    %c0_i32 = arith.constant 0 : i32
    %c0_i32_0 = arith.constant 0 : i32
    %c0_i32_1 = arith.constant 0 : i32
    return %c0_i32, %c0_i32_0 : i32, i32
  }
  func.func @transform_10(%arg0: i32) -> (i32, i32) {
    %c0_i32 = arith.constant 0 : i32
    %c0_i32_0 = arith.constant 0 : i32
    %c0_i32_1 = arith.constant 0 : i32
    return %c0_i32, %c0_i32_0 : i32, i32
  }
  func.func @transform_11(%arg0: i32) -> (i32, i32) {
    %c0_i32 = arith.constant 0 : i32
    %c0_i32_0 = arith.constant 0 : i32
    return %arg0, %c0_i32 : i32, i32
  }
}

</mosaic_0001>

<llo_original>
// kernel: tpu_custom_call.1
$region0: #{tpu_custom_call.1}
  #allocation0 [shape = 'u32[]', space=smem, size = 0x4, offset = 0x4, fixed_abs, tag = 'smem constant byte address 0x4 - core index']
  #allocation1 [shape = 'u32[144,128]{1,0:T(1,128)}', space=vmem, size = 0x12000, scoped, tag = 'internal scratch']
  %s0 = inlined_call_operand.hbm [shape: f32[2,8,32], index: 0, kind: input, shape index: {}]
  %s1 = inlined_call_operand.vmem [shape: f32[2,16,32], index: 1, kind: input, shape index: {}]
  %s2 = inlined_call_operand.hbm [shape: f32[2,8,8], index: 2, kind: input, shape index: {}]
  %s3 = inlined_call_operand.hbm [shape: f32[2,8,16], index: 3, kind: input, shape index: {}]
  %s4 = inlined_call_operand.vmem [shape: f32[32,48], index: 4, kind: input, shape index: {}]
  %s5 = inlined_call_operand.hbm [shape: f32[16,32], index: 5, kind: input, shape index: {}]
  %s6 = inlined_call_operand.vmem [shape: f32[32,16], index: 6, kind: input, shape index: {}]
  %s7 = inlined_call_operand.vmem [shape: f32[32,32], index: 7, kind: input, shape index: {}]
  %s8 = inlined_call_operand.hbm [shape: f32[16,32], index: 8, kind: input, shape index: {}]
  %s9 = inlined_call_operand.vmem [shape: f32[32,64], index: 9, kind: input, shape index: {}]
  %s10 = inlined_call_operand.vmem [shape: f32[64,32], index: 10, kind: input, shape index: {}]
  %s11 = inlined_call_operand.hbm [shape: f32[16,32], index: 11, kind: output, shape index: {}]
  %s12 = sld [smem:[#allocation0]]
  $region97: #{tpu_custom_call.1} parent=0
    _
  %s14 = ssub.s32 1, %s12
  %s15 = scalar_select 0, %s14, %s12
  $region1: #{tpu_custom_call.1} parent=0
    #allocation2 [shape = 'u8[8192]{0}', space=vmem, size = 0x2000, scoped, tag = 'input window, operand 0']
    #allocation3 [shape = 's32[2]{0}', space=sflag, size = 0x8, scoped, tag = 'scoped memory for tpu_custom_call.1']
    #allocation4 [shape = 's32[2]{0}', space=sflag, size = 0x8, scoped, tag = 'scoped memory for tpu_custom_call.1']
    #allocation5 [shape = 'u8[8192]{0}', space=vmem, size = 0x2000, scoped, tag = 'input window, operand 2']
    #allocation6 [shape = 's32[2]{0}', space=sflag, size = 0x8, scoped, tag = 'scoped memory for tpu_custom_call.1']
    #allocation7 [shape = 'u8[8192]{0}', space=vmem, size = 0x2000, scoped, tag = 'input window, operand 3']
    #allocation8 [shape = 'u8[8192]{0}', space=vmem, size = 0x2000, scoped, tag = 'input window, operand 5, single buffered']
    #allocation9 [shape = 's32[1]{0}', space=sflag, size = 0x4, scoped, tag = 'scoped memory for tpu_custom_call.1']
    #allocation10 [shape = 'u8[8192]{0}', space=vmem, size = 0x2000, scoped, tag = 'input window, operand 8, single buffered']
    #allocation11 [shape = 'u8[8192]{0}', space=vmem, size = 0x2000, scoped, tag = 'output window, operand 0']
    %16 = vsyncpa [#allocation3], 0
    %s17 = scalar_lea.sflag [#allocation3], 1
    %18 = vsyncpa %s17, 0
    %19 = vsyncpa [#allocation6], 0
    %s20 = scalar_lea.sflag [#allocation6], 1
    %21 = vsyncpa %s20, 0
    %22 = vsyncpa [#allocation9], 0
    %23 = vsyncpa [#allocation4], 0
    %s24 = scalar_lea.sflag [#allocation4], 1
    %25 = vsyncpa %s24, 0
    loop: start=0, step=1, limit=4
    $region2: #{tpu_custom_call.1} parent=1 // loop_pre_header
      _
    $region3: #{tpu_custom_call.1} parent=1 // loop_header
      %s27 = sphi 0, %s31
      %p28 = scmp.ge.s32.totalorder %s27, 4
      %s37 = sphi 0, %s39
      %s40 = sphi 0, %s37
      %s41 = sphi 0, %s40
      %s57 = sphi 0, %s41
      %s63 = sphi 0, %s65
      %s66 = sphi 0, %s63
      %s67 = sphi 0, %s66
      %s83 = sphi 0, %s67
      %s89 = sphi 0, %s91
      %s92 = sphi 0, %s89
      %s93 = sphi 0, %s92
      %s109 = sphi 0, %s93
      %s115 = sphi 0, %s117
      %s118 = sphi 0, %s115
      %s119 = sphi 0, %s118
      %s135 = sphi 0, %s119
      %s139 = sphi 0, %s139
      %s141 = sphi 0, %s139
      %s142 = sphi 0, %s141
      %s156 = sphi 0, %s142
      %s160 = sphi 0, %s160
      %s162 = sphi 0, %s160
      %s163 = sphi 0, %s162
      %s177 = sphi 0, %s163
      %s181 = sphi 0, %s181
      %s183 = sphi 0, %s181
      %s184 = sphi 0, %s183
      %s198 = sphi 0, %s184
      %s202 = sphi 0, %s202
      %s204 = sphi 0, %s202
      %s205 = sphi 0, %s204
      %s219 = sphi 0, %s205
      %s223 = sphi 0, %s223
      %s225 = sphi 0, %s223
      %s226 = sphi 0, %s225
      %s240 = sphi 0, %s226
      %s244 = sphi 0, %s244
      %s246 = sphi 0, %s244
      %s247 = sphi 0, %s246
      %s261 = sphi 0, %s247
      %s265 = sphi 0, %s265
      %s267 = sphi 0, %s265
      %s268 = sphi 0, %s267
      %s282 = sphi 0, %s268
      %s288 = sphi 0, %s290
      %s291 = sphi 0, %s288
      %s292 = sphi 0, %s291
      %s308 = sphi 0, %s292
    $region4: #{tpu_custom_call.1} parent=1 // loop_header_branch
      %30 = sbr.rel (%p28) target = $region8
    $region5: #{tpu_custom_call.1} parent=1 // loop_body
      %s32 = ssub.s32 %s27, 1
      %s33 = ssub.s32 %s27, 2
      %s34 = sadd.s32 %s27, 1
      %s35 = ssub.s32 %s27, %s34
      %p36 = scmp.eq.s32.totalorder %s35, 0
      %s38 = sadd.s32 %s37, 1
      %s39 = scalar_select %p36, %s37, %s38
      %p42 = pneg %p36
      %p43 = scmp.eq.s32.totalorder %s27, 1
      %p44 = por %p42, %p43
      %p45 = scmp.ne.s32.totalorder %s37, %s40
      %p46 = scmp.eq.s32.totalorder %s27, 0
      %p47 = por %p45, %p46
      %p48 = scmp.ne.s32.totalorder %s37, %s40
      %p49 = scmp.eq.s32.totalorder %s32, 1
      %p50 = por %p48, %p49
      %p51 = scmp.ne.s32.totalorder %s40, %s41
      %p52 = scmp.eq.s32.totalorder %s32, 0
      %p53 = por %p51, %p52
      %p54 = scmp.ne.s32.totalorder %s40, %s41
      %p55 = scmp.eq.s32.totalorder %s33, 1
      %p56 = por %p54, %p55
      %p58 = scmp.ne.s32.totalorder %s41, %s57
      %p59 = scmp.eq.s32.totalorder %s33, 0
      %p60 = por %p58, %p59
      %s61 = ssub.s32 %s27, %s34
      %p62 = scmp.eq.s32.totalorder %s61, 0
      %s64 = sadd.s32 %s63, 1
      %s65 = scalar_select %p62, %s63, %s64
      %p68 = pneg %p62
      %p69 = scmp.eq.s32.totalorder %s27, 1
      %p70 = por %p68, %p69
      %p71 = scmp.ne.s32.totalorder %s63, %s66
      %p72 = scmp.eq.s32.totalorder %s27, 0
      %p73 = por %p71, %p72
      %p74 = scmp.ne.s32.totalorder %s63, %s66
      %p75 = scmp.eq.s32.totalorder %s32, 1
      %p76 = por %p74, %p75
      %p77 = scmp.ne.s32.totalorder %s66, %s67
      %p78 = scmp.eq.s32.totalorder %s32, 0
      %p79 = por %p77, %p78
      %p80 = scmp.ne.s32.totalorder %s66, %s67
      %p81 = scmp.eq.s32.totalorder %s33, 1
      %p82 = por %p80, %p81
      %p84 = scmp.ne.s32.totalorder %s67, %s83
      %p85 = scmp.eq.s32.totalorder %s33, 0
      %p86 = por %p84, %p85
      %s87 = ssub.s32 %s27, %s34
      %p88 = scmp.eq.s32.totalorder %s87, 0
      %s90 = sadd.s32 %s89, 1
      %s91 = scalar_select %p88, %s89, %s90
      %p94 = pneg %p88
      %p95 = scmp.eq.s32.totalorder %s27, 1
      %p96 = por %p94, %p95
      %p97 = scmp.ne.s32.totalorder %s89, %s92
      %p98 = scmp.eq.s32.totalorder %s27, 0
      %p99 = por %p97, %p98
      %p100 = scmp.ne.s32.totalorder %s89, %s92
      %p101 = scmp.eq.s32.totalorder %s32, 1
      %p102 = por %p100, %p101
      %p103 = scmp.ne.s32.totalorder %s92, %s93
      %p104 = scmp.eq.s32.totalorder %s32, 0
      %p105 = por %p103, %p104
      %p106 = scmp.ne.s32.totalorder %s92, %s93
      %p107 = scmp.eq.s32.totalorder %s33, 1
      %p108 = por %p106, %p107
      %p110 = scmp.ne.s32.totalorder %s93, %s109
      %p111 = scmp.eq.s32.totalorder %s33, 0
      %p112 = por %p110, %p111
      %s113 = ssub.s32 %s27, %s34
      %p114 = scmp.eq.s32.totalorder %s113, 0
      %s116 = sadd.s32 %s115, 1
      %s117 = scalar_select %p114, %s115, %s116
      %p120 = pneg %p114
      %p121 = scmp.eq.s32.totalorder %s27, 1
      %p122 = por %p120, %p121
      %p123 = scmp.ne.s32.totalorder %s115, %s118
      %p124 = scmp.eq.s32.totalorder %s27, 0
      %p125 = por %p123, %p124
      %p126 = scmp.ne.s32.totalorder %s115, %s118
      %p127 = scmp.eq.s32.totalorder %s32, 1
      %p128 = por %p126, %p127
      %p129 = scmp.ne.s32.totalorder %s118, %s119
      %p130 = scmp.eq.s32.totalorder %s32, 0
      %p131 = por %p129, %p130
      %p132 = scmp.ne.s32.totalorder %s118, %s119
      %p133 = scmp.eq.s32.totalorder %s33, 1
      %p134 = por %p132, %p133
      %p136 = scmp.ne.s32.totalorder %s119, %s135
      %p137 = scmp.eq.s32.totalorder %s33, 0
      %p138 = por %p136, %p137
      %s140 = sadd.s32 %s139, 1
      %p143 = scmp.eq.s32.totalorder %s27, 1
      %p144 = scmp.ne.s32.totalorder %s139, %s141
      %p145 = scmp.eq.s32.totalorder %s27, 0
      %p146 = por %p144, %p145
      %p147 = scmp.ne.s32.totalorder %s139, %s141
      %p148 = scmp.eq.s32.totalorder %s32, 1
      %p149 = por %p147, %p148
      %p150 = scmp.ne.s32.totalorder %s141, %s142
      %p151 = scmp.eq.s32.totalorder %s32, 0
      %p152 = por %p150, %p151
      %p153 = scmp.ne.s32.totalorder %s141, %s142
      %p154 = scmp.eq.s32.totalorder %s33, 1
      %p155 = por %p153, %p154
      %p157 = scmp.ne.s32.totalorder %s142, %s156
      %p158 = scmp.eq.s32.totalorder %s33, 0
      %p159 = por %p157, %p158
      %s161 = sadd.s32 %s160, 1
      %p164 = scmp.eq.s32.totalorder %s27, 1
      %p165 = scmp.ne.s32.totalorder %s160, %s162
      %p166 = scmp.eq.s32.totalorder %s27, 0
      %p167 = por %p165, %p166
      %p168 = scmp.ne.s32.totalorder %s160, %s162
      %p169 = scmp.eq.s32.totalorder %s32, 1
      %p170 = por %p168, %p169
      %p171 = scmp.ne.s32.totalorder %s162, %s163
      %p172 = scmp.eq.s32.totalorder %s32, 0
      %p173 = por %p171, %p172
      %p174 = scmp.ne.s32.totalorder %s162, %s163
      %p175 = scmp.eq.s32.totalorder %s33, 1
      %p176 = por %p174, %p175
      %p178 = scmp.ne.s32.totalorder %s163, %s177
      %p179 = scmp.eq.s32.totalorder %s33, 0
      %p180 = por %p178, %p179
      %s182 = sadd.s32 %s181, 1
      %p185 = scmp.eq.s32.totalorder %s27, 1
      %p186 = scmp.ne.s32.totalorder %s181, %s183
      %p187 = scmp.eq.s32.totalorder %s27, 0
      %p188 = por %p186, %p187
      %p189 = scmp.ne.s32.totalorder %s181, %s183
      %p190 = scmp.eq.s32.totalorder %s32, 1
      %p191 = por %p189, %p190
      %p192 = scmp.ne.s32.totalorder %s183, %s184
      %p193 = scmp.eq.s32.totalorder %s32, 0
      %p194 = por %p192, %p193
      %p195 = scmp.ne.s32.totalorder %s183, %s184
      %p196 = scmp.eq.s32.totalorder %s33, 1
      %p197 = por %p195, %p196
      %p199 = scmp.ne.s32.totalorder %s184, %s198
      %p200 = scmp.eq.s32.totalorder %s33, 0
      %p201 = por %p199, %p200
      %s203 = sadd.s32 %s202, 1
      %p206 = scmp.eq.s32.totalorder %s27, 1
      %p207 = scmp.ne.s32.totalorder %s202, %s204
      %p208 = scmp.eq.s32.totalorder %s27, 0
      %p209 = por %p207, %p208
      %p210 = scmp.ne.s32.totalorder %s202, %s204
      %p211 = scmp.eq.s32.totalorder %s32, 1
      %p212 = por %p210, %p211
      %p213 = scmp.ne.s32.totalorder %s204, %s205
      %p214 = scmp.eq.s32.totalorder %s32, 0
      %p215 = por %p213, %p214
      %p216 = scmp.ne.s32.totalorder %s204, %s205
      %p217 = scmp.eq.s32.totalorder %s33, 1
      %p218 = por %p216, %p217
      %p220 = scmp.ne.s32.totalorder %s205, %s219
      %p221 = scmp.eq.s32.totalorder %s33, 0
      %p222 = por %p220, %p221
      %s224 = sadd.s32 %s223, 1
      %p227 = scmp.eq.s32.totalorder %s27, 1
      %p228 = scmp.ne.s32.totalorder %s223, %s225
      %p229 = scmp.eq.s32.totalorder %s27, 0
      %p230 = por %p228, %p229
      %p231 = scmp.ne.s32.totalorder %s223, %s225
      %p232 = scmp.eq.s32.totalorder %s32, 1
      %p233 = por %p231, %p232
      %p234 = scmp.ne.s32.totalorder %s225, %s226
      %p235 = scmp.eq.s32.totalorder %s32, 0
      %p236 = por %p234, %p235
      %p237 = scmp.ne.s32.totalorder %s225, %s226
      %p238 = scmp.eq.s32.totalorder %s33, 1
      %p239 = por %p237, %p238
      %p241 = scmp.ne.s32.totalorder %s226, %s240
      %p242 = scmp.eq.s32.totalorder %s33, 0
      %p243 = por %p241, %p242
      %s245 = sadd.s32 %s244, 1
      %p248 = scmp.eq.s32.totalorder %s27, 1
      %p249 = scmp.ne.s32.totalorder %s244, %s246
      %p250 = scmp.eq.s32.totalorder %s27, 0
      %p251 = por %p249, %p250
      %p252 = scmp.ne.s32.totalorder %s244, %s246
      %p253 = scmp.eq.s32.totalorder %s32, 1
      %p254 = por %p252, %p253
      %p255 = scmp.ne.s32.totalorder %s246, %s247
      %p256 = scmp.eq.s32.totalorder %s32, 0
      %p257 = por %p255, %p256
      %p258 = scmp.ne.s32.totalorder %s246, %s247
      %p259 = scmp.eq.s32.totalorder %s33, 1
      %p260 = por %p258, %p259
      %p262 = scmp.ne.s32.totalorder %s247, %s261
      %p263 = scmp.eq.s32.totalorder %s33, 0
      %p264 = por %p262, %p263
      %s266 = sadd.s32 %s265, 1
      %p269 = scmp.eq.s32.totalorder %s27, 1
      %p270 = scmp.ne.s32.totalorder %s265, %s267
      %p271 = scmp.eq.s32.totalorder %s27, 0
      %p272 = por %p270, %p271
      %p273 = scmp.ne.s32.totalorder %s265, %s267
      %p274 = scmp.eq.s32.totalorder %s32, 1
      %p275 = por %p273, %p274
      %p276 = scmp.ne.s32.totalorder %s267, %s268
      %p277 = scmp.eq.s32.totalorder %s32, 0
      %p278 = por %p276, %p277
      %p279 = scmp.ne.s32.totalorder %s267, %s268
      %p280 = scmp.eq.s32.totalorder %s33, 1
      %p281 = por %p279, %p280
      %p283 = scmp.ne.s32.totalorder %s268, %s282
      %p284 = scmp.eq.s32.totalorder %s33, 0
      %p285 = por %p283, %p284
      %s286 = ssub.s32 %s27, %s34
      %p287 = scmp.eq.s32.totalorder %s286, 0
      %s289 = sadd.s32 %s288, 1
      %s290 = scalar_select %p287, %s288, %s289
      %p293 = pneg %p287
      %p294 = scmp.eq.s32.totalorder %s27, 1
      %p295 = por %p293, %p294
      %p296 = scmp.ne.s32.totalorder %s288, %s291
      %p297 = scmp.eq.s32.totalorder %s27, 0
      %p298 = por %p296, %p297
      %p299 = scmp.ne.s32.totalorder %s288, %s291
      %p300 = scmp.eq.s32.totalorder %s32, 1
      %p301 = por %p299, %p300
      %p302 = scmp.ne.s32.totalorder %s291, %s292
      %p303 = scmp.eq.s32.totalorder %s32, 0
      %p304 = por %p302, %p303
      %p305 = scmp.ne.s32.totalorder %s291, %s292
      %p306 = scmp.eq.s32.totalorder %s33, 1
      %p307 = por %p305, %p306
      %p309 = scmp.ne.s32.totalorder %s292, %s308
      %p310 = scmp.eq.s32.totalorder %s33, 0
      %p311 = por %p309, %p310
      %p312 = scmp.le.s32.totalorder 1, %s27
      %p313 = scmp.lt.s32.totalorder %s27, 3
      %p314 = pnand %p312, %p313
      %p315 = pneg %p314
      // Predicated region
      $region9: #{tpu_custom_call.1} parent=5 // pred_check
        _
      $region10: #{tpu_custom_call.1} parent=5 // pred_check_branch
        %317 = sbr.rel (%p314) target = $region12
      $region11: #{tpu_custom_call.1} parent=5 // pred_region
        %s318 = ssub.s32 %s27, 1
        // Predicated region
        $region13: #{tpu_custom_call.1} parent=11 // pred_check
          %p319 = pneg %p152
        $region14: #{tpu_custom_call.1} parent=11 // pred_check_branch
          %321 = sbr.rel (%p319) target = $region16
        $region15: #{tpu_custom_call.1} parent=11 // pred_region
          _
        $region16: #{tpu_custom_call.1} parent=11 // pred_fallthru
          _
        // Predicated region
        $region17: #{tpu_custom_call.1} parent=11 // pred_check
          %p322 = pneg %p173
        $region18: #{tpu_custom_call.1} parent=11 // pred_check_branch
          %324 = sbr.rel (%p322) target = $region20
        $region19: #{tpu_custom_call.1} parent=11 // pred_region
          %s326 = ssub.s32 256, 256
          %327 = vsyncadd [#allocation9], %s326
          %s328 = sshll.u32 [#allocation8], 4
          %s329 = int_to_ptr.vmem [resolvable:$true] %s328
          %334 = dma.hbm_to_vmem [thread:$0]  %s5, 256, %s329, [#allocation9], 128, 128, 8
        $region20: #{tpu_custom_call.1} parent=11 // pred_fallthru
          _
        // Predicated region
        $region21: #{tpu_custom_call.1} parent=11 // pred_check
          %p335 = pneg %p194
        $region22: #{tpu_custom_call.1} parent=11 // pred_check_branch
          %337 = sbr.rel (%p335) target = $region24
        $region23: #{tpu_custom_call.1} parent=11 // pred_region
          _
        $region24: #{tpu_custom_call.1} parent=11 // pred_fallthru
          _
        // Predicated region
        $region25: #{tpu_custom_call.1} parent=11 // pred_check
          %p338 = pneg %p215
        $region26: #{tpu_custom_call.1} parent=11 // pred_check_branch
          %340 = sbr.rel (%p338) target = $region28
        $region27: #{tpu_custom_call.1} parent=11 // pred_region
          _
        $region28: #{tpu_custom_call.1} parent=11 // pred_fallthru
          _
        // Predicated region
        $region29: #{tpu_custom_call.1} parent=11 // pred_check
          %p341 = pneg %p236
        $region30: #{tpu_custom_call.1} parent=11 // pred_check_branch
          %343 = sbr.rel (%p341) target = $region32
        $region31: #{tpu_custom_call.1} parent=11 // pred_region
          %s345 = ssub.s32 256, 256
          %346 = vsyncadd [#allocation9], %s345
          %s347 = sshll.u32 [#allocation10], 4
          %s348 = int_to_ptr.vmem [resolvable:$true] %s347
          %353 = dma.hbm_to_vmem [thread:$0]  %s8, 256, %s348, [#allocation9], 128, 128, 8
        $region32: #{tpu_custom_call.1} parent=11 // pred_fallthru
          _
        // Predicated region
        $region33: #{tpu_custom_call.1} parent=11 // pred_check
          %p354 = pneg %p257
        $region34: #{tpu_custom_call.1} parent=11 // pred_check_branch
          %356 = sbr.rel (%p354) target = $region36
        $region35: #{tpu_custom_call.1} parent=11 // pred_region
          _
        $region36: #{tpu_custom_call.1} parent=11 // pred_fallthru
          _
        // Predicated region
        $region37: #{tpu_custom_call.1} parent=11 // pred_check
          %p357 = pneg %p278
        $region38: #{tpu_custom_call.1} parent=11 // pred_check_branch
          %359 = sbr.rel (%p357) target = $region40
        $region39: #{tpu_custom_call.1} parent=11 // pred_region
          _
        $region40: #{tpu_custom_call.1} parent=11 // pred_fallthru
          _
      $region12: #{tpu_custom_call.1} parent=5 // pred_fallthru
        _
      %p360 = scmp.lt.s32.totalorder %s27, 2
      // Predicated region
      $region41: #{tpu_custom_call.1} parent=5 // pred_check
        %p361 = pneg %p360
      $region42: #{tpu_custom_call.1} parent=5 // pred_check_branch
        %363 = sbr.rel (%p361) target = $region44
      $region43: #{tpu_custom_call.1} parent=5 // pred_region
        // Predicated region
        $region45: #{tpu_custom_call.1} parent=43 // pred_check
          %p364 = pneg %p47
        $region46: #{tpu_custom_call.1} parent=43 // pred_check_branch
          %366 = sbr.rel (%p364) target = $region48
        $region47: #{tpu_custom_call.1} parent=43 // pred_region
          %s367 = sand.u32 %s37, 1
          %s368 = scalar_lea.sflag [#allocation3], %s367
          %s369 = sand.u32 %s37, 1
          %s370 = smul.addr %s369, 8
          %s371 = scalar_lea.vmem [#allocation2], %s370
          %s373 = ssub.s32 128, 128
          %374 = vsyncadd %s368, %s373
          %s375 = smul.addr %s27, 128
          %s376 = scalar_lea.hbm %s0, %s375
          %s378 = sshll.u32 %s371, 4
          %s379 = int_to_ptr.vmem [resolvable:$true] %s378
          %381 = dma.hbm_to_vmem [thread:$0]  %s376, 128, %s379, %s368
        $region48: #{tpu_custom_call.1} parent=43 // pred_fallthru
          _
        // Predicated region
        $region49: #{tpu_custom_call.1} parent=43 // pred_check
          %p382 = pneg %p73
        $region50: #{tpu_custom_call.1} parent=43 // pred_check_branch
          %384 = sbr.rel (%p382) target = $region52
        $region51: #{tpu_custom_call.1} parent=43 // pred_region
          %p385 = scmp.lt.s32.totalorder %s27, 1
          %s386 = scalar_select %p385, %s27, 1
          %s387 = smul.addr %s386, 2
          %s388 = smul.addr %s387, 8
          %s389 = scalar_lea.vmem %s1, %s388
        $region52: #{tpu_custom_call.1} parent=43 // pred_fallthru
          _
        // Predicated region
        $region53: #{tpu_custom_call.1} parent=43 // pred_check
          %p390 = pneg %p99
        $region54: #{tpu_custom_call.1} parent=43 // pred_check_branch
          %392 = sbr.rel (%p390) target = $region56
        $region55: #{tpu_custom_call.1} parent=43 // pred_region
          %s393 = sand.u32 %s27, 1
          %s394 = scalar_lea.sflag [#allocation6], %s393
          %s395 = sand.u32 %s89, 1
          %s396 = smul.addr %s395, 8
          %s397 = scalar_lea.vmem [#allocation5], %s396
          %s399 = ssub.s32 128, 128
          %400 = vsyncadd %s394, %s399
          %s401 = smul.addr %s27, 128
          %s402 = scalar_lea.hbm %s2, %s401
          %s404 = sshll.u32 %s397, 4
          %s405 = int_to_ptr.vmem [resolvable:$true] %s404
          %407 = dma.hbm_to_vmem [thread:$0]  %s402, 128, %s405, %s394
        $region56: #{tpu_custom_call.1} parent=43 // pred_fallthru
          _
        // Predicated region
        $region57: #{tpu_custom_call.1} parent=43 // pred_check
          %p408 = pneg %p125
        $region58: #{tpu_custom_call.1} parent=43 // pred_check_branch
          %410 = sbr.rel (%p408) target = $region60
        $region59: #{tpu_custom_call.1} parent=43 // pred_region
          %s411 = sand.u32 %s27, 1
          %s412 = scalar_lea.sflag [#allocation6], %s411
          %s413 = sand.u32 %s115, 1
          %s414 = smul.addr %s413, 8
          %s415 = scalar_lea.vmem [#allocation7], %s414
          %s417 = ssub.s32 128, 128
          %418 = vsyncadd %s412, %s417
          %s419 = smul.addr %s27, 128
          %s420 = scalar_lea.hbm %s3, %s419
          %s422 = sshll.u32 %s415, 4
          %s423 = int_to_ptr.vmem [resolvable:$true] %s422
          %425 = dma.hbm_to_vmem [thread:$0]  %s420, 128, %s423, %s412
        $region60: #{tpu_custom_call.1} parent=43 // pred_fallthru
          _
      $region44: #{tpu_custom_call.1} parent=5 // pred_fallthru
        _
      %p426 = scmp.le.s32.totalorder 1, %s27
      %p427 = scmp.lt.s32.totalorder %s27, 3
      %p428 = pnand %p426, %p427
      %p429 = pneg %p428
      // Predicated region
      $region61: #{tpu_custom_call.1} parent=5 // pred_check
        _
      $region62: #{tpu_custom_call.1} parent=5 // pred_check_branch
        %431 = sbr.rel (%p428) target = $region64
      $region63: #{tpu_custom_call.1} parent=5 // pred_region
        %s432 = ssub.s32 %s27, 1
        %s433 = sand.u32 %s40, 1
        %s434 = scalar_lea.sflag [#allocation3], %s433
        %s435 = sand.u32 %s40, 1
        %s436 = smul.addr %s435, 8
        %s437 = scalar_lea.vmem [#allocation2], %s436
        // Predicated region
        $region65: #{tpu_custom_call.1} parent=63 // pred_check
          %p438 = pneg %p53
        $region66: #{tpu_custom_call.1} parent=63 // pred_check_branch
          %440 = sbr.rel (%p438) target = $region68
        $region67: #{tpu_custom_call.1} parent=63 // pred_region
          %441 = dma.done %s434, 128
        $region68: #{tpu_custom_call.1} parent=63 // pred_fallthru
          _
        %s442 = sand.u32 %s32, 1
        %s443 = scalar_lea.sflag [#allocation6], %s442
        %s444 = sand.u32 %s92, 1
        %s445 = smul.addr %s444, 8
        %s446 = scalar_lea.vmem [#allocation5], %s445
        // Predicated region
        $region69: #{tpu_custom_call.1} parent=63 // pred_check
          %p447 = pneg %p105
        $region70: #{tpu_custom_call.1} parent=63 // pred_check_branch
          %449 = sbr.rel (%p447) target = $region72
        $region71: #{tpu_custom_call.1} parent=63 // pred_region
          %450 = dma.done %s443, 128
        $region72: #{tpu_custom_call.1} parent=63 // pred_fallthru
          _
        %s451 = sand.u32 %s32, 1
        %s452 = scalar_lea.sflag [#allocation6], %s451
        %s453 = sand.u32 %s118, 1
        %s454 = smul.addr %s453, 8
        %s455 = scalar_lea.vmem [#allocation7], %s454
        // Predicated region
        $region73: #{tpu_custom_call.1} parent=63 // pred_check
          %p456 = pneg %p131
        $region74: #{tpu_custom_call.1} parent=63 // pred_check_branch
          %458 = sbr.rel (%p456) target = $region76
        $region75: #{tpu_custom_call.1} parent=63 // pred_region
          %459 = dma.done %s452, 128
        $region76: #{tpu_custom_call.1} parent=63 // pred_fallthru
          _
        // Predicated region
        $region77: #{tpu_custom_call.1} parent=63 // pred_check
          %p460 = pneg %p173
        $region78: #{tpu_custom_call.1} parent=63 // pred_check_branch
          %462 = sbr.rel (%p460) target = $region80
        $region79: #{tpu_custom_call.1} parent=63 // pred_region
          %463 = dma.done [#allocation9], 256
        $region80: #{tpu_custom_call.1} parent=63 // pred_fallthru
          _
        // Predicated region
        $region81: #{tpu_custom_call.1} parent=63 // pred_check
          %p464 = pneg %p236
        $region82: #{tpu_custom_call.1} parent=63 // pred_check_branch
          %466 = sbr.rel (%p464) target = $region84
        $region83: #{tpu_custom_call.1} parent=63 // pred_region
          %467 = dma.done [#allocation9], 256
        $region84: #{tpu_custom_call.1} parent=63 // pred_fallthru
          _
        %s468 = sand.u32 %s40, 1
        %s469 = scalar_lea.sflag [#allocation3], %s468
        %s470 = sand.u32 %s40, 1
        %s471 = smul.addr %s470, 8
        %s472 = scalar_lea.vmem [#allocation2], %s471
        %p473 = pneg %p53
        %p474 = pneg %p50
        %p475 = scmp.lt.s32.totalorder %s32, 1
        %s476 = scalar_select %p475, %s32, 1
        %s477 = smul.addr %s476, 2
        %s478 = smul.addr %s477, 8
        %s479 = scalar_lea.vmem %s1, %s478
        %p480 = pneg %p79
        %p481 = pneg %p76
        %s482 = sand.u32 %s32, 1
        %s483 = scalar_lea.sflag [#allocation6], %s482
        %s484 = sand.u32 %s92, 1
        %s485 = smul.addr %s484, 8
        %s486 = scalar_lea.vmem [#allocation5], %s485
        %p487 = pneg %p105
        %p488 = pneg %p102
        %s489 = sand.u32 %s32, 1
        %s490 = scalar_lea.sflag [#allocation6], %s489
        %s491 = sand.u32 %s118, 1
        %s492 = smul.addr %s491, 8
        %s493 = scalar_lea.vmem [#allocation7], %s492
        %p494 = pneg %p131
        %p495 = pneg %p128
        %p496 = pneg %p152
        %p497 = pneg %p149
        %p498 = pneg %p173
        %p499 = pneg %p170
        %p500 = pneg %p194
        %p501 = pneg %p191
        %p502 = pneg %p215
        %p503 = pneg %p212
        %p504 = pneg %p236
        %p505 = pneg %p233
        %p506 = pneg %p257
        %p507 = pneg %p254
        %p508 = pneg %p278
        %p509 = pneg %p275
        %p510 = pneg %p304
        %p511 = pneg %p301
        %s512 = sand.u32 %s291, 1
        %s513 = scalar_lea.sflag [#allocation4], %s512
        %s514 = sand.u32 %s291, 1
        %s515 = smul.addr %s514, 8
        %s516 = scalar_lea.vmem [#allocation11], %s515
        %p517 = scmp.lt.s32.totalorder %s32, 1
        %s518 = scalar_select %p517, %s32, 1
        %s519 = smul.addr %s518, 2
        %s520 = smul.addr %s519, 8
        %s521 = scalar_lea.vmem %s1, %s520
        %v522 = vld [vmem:[%s437] sm:$0xff]
        %v523 = vld [vmem:[%s521] sm:$0xff]
        %v524 = vld [vmem:[%s521 + $0x8] sm:$0xff]
        %v525 = vld [vmem:[%s446] sm:$0xff]
        %v526 = vld [vmem:[%s4] sm:$0xff]
        %v527 = vld [vmem:[%s4 + $0x8] sm:$0xff]
        %v528 = vld [vmem:[%s4 + $0x10] sm:$0xff]
        %v529 = vld [vmem:[%s4 + $0x18] sm:$0xff]
        %v530 = vld [vmem:[#allocation8] sm:$0xff]
        %v531 = vld [vmem:[#allocation8 + $0x8] sm:$0xff]
        %vm532 = vcmask 261120
        %v534 = vsel %vm532, %v522, 0
        %536 = vmatprep.subr.mxu0 0.0
        %537 = vmatpush1.msra.mxu0 %v526
        %538 = vmatprep.subr.mxu0 0.0
        %539 = vmatpush1.msra.mxu0 %v527
        %540 = vmatprep.subr.mxu0 0.0
        %541 = vmatpush1.msra.mxu0 %v528
        %542 = vmatprep.subr.mxu0 0.0
        %543 = vmatpush1.msra.mxu0 %v529
        %544 = vmatprep.subr.mxu0 0.0
        %545 = vmatpush1.msra.mxu0 0.0
        %546 = vmatprep.subr.mxu0 0.0
        %547 = vmatpush1.msra.mxu0 0.0
        %548 = vmatprep.subr.mxu0 0.0
        %549 = vmatpush1.msra.mxu0 0.0
        %550 = vmatprep.subr.mxu0 0.0
        %551 = vmatpush1.msra.mxu0 0.0
        %552 = vmatprep.subr.mxu0 0.0
        %553 = vmatpush1.msra.mxu0 0.0
        %554 = vmatprep.subr.mxu0 0.0
        %555 = vmatpush1.msra.mxu0 0.0
        %556 = vmatprep.subr.mxu0 0.0
        %557 = vmatpush1.msra.mxu0 0.0
        %558 = vmatprep.subr.mxu0 0.0
        %559 = vmatpush1.msra.mxu0 0.0
        %560 = vmatprep.subr.mxu0 0.0
        %561 = vmatpush1.msra.mxu0 0.0
        %562 = vmatprep.subr.mxu0 0.0
        %563 = vmatpush1.msra.mxu0 0.0
        %564 = vmatprep.subr.mxu0 0.0
        %565 = vmatpush1.msra.mxu0 0.0
        %566 = vmatprep.subr.mxu0 0.0
        %567 = vmatpush1.msra.mxu0 0.0
        %568 = vmatprep.subr.mxu0 0.0
        %569 = vmatpush1.msra.mxu0 0.0
        %570 = vmatprep.subr.mxu0 0.0
        %571 = vmatpush1.msra.mxu0 0.0
        %572 = vmatprep.subr.mxu0 0.0
        %573 = vmatpush1.msra.mxu0 0.0
        %574 = vmatprep.subr.mxu0 0.0
        %575 = vmatpush1.msra.mxu0 0.0
        %576 = vmatprep.subr.mxu0 0.0
        %577 = vmatpush1.msra.mxu0 0.0
        %578 = vmatprep.subr.mxu0 0.0
        %579 = vmatpush1.msra.mxu0 0.0
        %580 = vmatprep.subr.mxu0 0.0
        %581 = vmatpush1.msra.mxu0 0.0
        %582 = vmatprep.subr.mxu0 0.0
        %583 = vmatpush1.msra.mxu0 0.0
        %584 = vmatprep.subr.mxu0 0.0
        %585 = vmatpush1.msra.mxu0 0.0
        %586 = vmatprep.subr.mxu0 0.0
        %587 = vmatpush1.msra.mxu0 0.0
        %588 = vmatprep.subr.mxu0 0.0
        %589 = vmatpush1.msra.mxu0 0.0
        %590 = vmatprep.subr.mxu0 0.0
        %591 = vmatpush1.msra.mxu0 0.0
        %592 = vmatprep.subr.mxu0 0.0
        %593 = vmatpush1.msra.mxu0 0.0
        %594 = vmatprep.subr.mxu0 0.0
        %595 = vmatpush1.msra.mxu0 0.0
        %596 = vmatprep.subr.mxu0 0.0
        %597 = vmatpush1.msra.mxu0 0.0
        %598 = vmatprep.subr.mxu0 0.0
        %599 = vmatpush1.msra.mxu0 0.0
        %600 = vmatprep.mubr.f32.mxu0 0.0
        %601 = vmatmul.mubr.f32.gmra.mrb[0].mxu0 %v534
        %v602 = vpop.f32.mrb[0].mxu0
        %v603 = vadd.f32 0.0, %v602
        %v604 = vpop.f32.mrb[0].mxu0
        %605 = vdwg.mxu0
        %607 = vrot.lane.b32.xlu0 %v603, 120
        %v608 = vpop.permute.xlu0 %607
        %609 = vrot.lane.b32.xlu0 %v603, 112
        %v610 = vpop.permute.xlu0 %609
        %vm611 = vcmask 64512
        %v612 = vsel %vm611, %v603, 0
        %v614 = vsel %vm611, %v610, 0
        %616 = vmatprep.subr.mxu0 0.0
        %617 = vmatpush1.xpose.msra.mxu0 %v614
        %618 = vmatprep.subr.mxu0 0.0
        %619 = vmatpush1.xpose.msra.mxu0 0.0
        %620 = vmatprep.subr.mxu0 0.0
        %621 = vmatpush1.xpose.msra.mxu0 0.0
        %622 = vmatprep.subr.mxu0 0.0
        %623 = vmatpush1.xpose.msra.mxu0 0.0
        %624 = vmatprep.subr.mxu0 0.0
        %625 = vmatpush1.xpose.msra.mxu0 0.0
        %626 = vmatprep.subr.mxu0 0.0
        %627 = vmatpush1.xpose.msra.mxu0 0.0
        %628 = vmatprep.subr.mxu0 0.0
        %629 = vmatpush1.xpose.msra.mxu0 0.0
        %630 = vmatprep.subr.mxu0 0.0
        %631 = vmatpush1.xpose.msra.mxu0 0.0
        %632 = vmatprep.subr.mxu0 0.0
        %633 = vmatpush1.xpose.msra.mxu0 0.0
        %634 = vmatprep.subr.mxu0 0.0
        %635 = vmatpush1.xpose.msra.mxu0 0.0
        %636 = vmatprep.subr.mxu0 0.0
        %637 = vmatpush1.xpose.msra.mxu0 0.0
        %638 = vmatprep.subr.mxu0 0.0
        %639 = vmatpush1.xpose.msra.mxu0 0.0
        %640 = vmatprep.subr.mxu0 0.0
        %641 = vmatpush1.xpose.msra.mxu0 0.0
        %642 = vmatprep.subr.mxu0 0.0
        %643 = vmatpush1.xpose.msra.mxu0 0.0
        %644 = vmatprep.subr.mxu0 0.0
        %645 = vmatpush1.xpose.msra.mxu0 0.0
        %646 = vmatprep.subr.mxu0 0.0
        %647 = vmatpush1.xpose.msra.mxu0 0.0
        %648 = vmatprep.subr.mxu0 0.0
        %649 = vmatpush1.xpose.msra.mxu0 0.0
        %650 = vmatprep.subr.mxu0 0.0
        %651 = vmatpush1.xpose.msra.mxu0 0.0
        %652 = vmatprep.subr.mxu0 0.0
        %653 = vmatpush1.xpose.msra.mxu0 0.0
        %654 = vmatprep.subr.mxu0 0.0
        %655 = vmatpush1.xpose.msra.mxu0 0.0
        %656 = vmatprep.subr.mxu0 0.0
        %657 = vmatpush1.xpose.msra.mxu0 0.0
        %658 = vmatprep.subr.mxu0 0.0
        %659 = vmatpush1.xpose.msra.mxu0 0.0
        %660 = vmatprep.subr.mxu0 0.0
        %661 = vmatpush1.xpose.msra.mxu0 0.0
        %662 = vmatprep.subr.mxu0 0.0
        %663 = vmatpush1.xpose.msra.mxu0 0.0
        %664 = vmatprep.subr.mxu0 0.0
        %665 = vmatpush1.xpose.msra.mxu0 0.0
        %666 = vmatprep.subr.mxu0 0.0
        %667 = vmatpush1.xpose.msra.mxu0 0.0
        %668 = vmatprep.subr.mxu0 0.0
        %669 = vmatpush1.xpose.msra.mxu0 0.0
        %670 = vmatprep.subr.mxu0 0.0
        %671 = vmatpush1.xpose.msra.mxu0 0.0
        %672 = vmatprep.subr.mxu0 0.0
        %673 = vmatpush1.xpose.msra.mxu0 0.0
        %674 = vmatprep.subr.mxu0 0.0
        %675 = vmatpush1.xpose.msra.mxu0 0.0
        %676 = vmatprep.subr.mxu0 0.0
        %677 = vmatpush1.xpose.msra.mxu0 0.0
        %678 = vmatprep.subr.mxu0 0.0
        %679 = vmatpush1.xpose.msra.mxu0 0.0
        %680 = vmatprep.mubr.f32.mxu0 0.0
        %681 = vmatmul.mubr.f32.gmra.mrb[0].mxu0 %v612
        %v682 = vpop.f32.mrb[0].mxu0
        %v683 = vadd.f32 0.0, %v682
        %v684 = vpop.f32.mrb[0].mxu0
        %685 = vdwg.mxu0
        %686 = vrot.lane.b32.xlu0 %v608, 112
        %v687 = vpop.permute.xlu0 %686
        %v688 = vsel %vm611, %v608, 0
        %v690 = vsel %vm611, %v687, 0
        %692 = vmatprep.subr.mxu0 0.0
        %693 = vmatpush1.xpose.msra.mxu0 %v690
        %694 = vmatprep.subr.mxu0 0.0
        %695 = vmatpush1.xpose.msra.mxu0 0.0
        %696 = vmatprep.subr.mxu0 0.0
        %697 = vmatpush1.xpose.msra.mxu0 0.0
        %698 = vmatprep.subr.mxu0 0.0
        %699 = vmatpush1.xpose.msra.mxu0 0.0
        %700 = vmatprep.subr.mxu0 0.0
        %701 = vmatpush1.xpose.msra.mxu0 0.0
        %702 = vmatprep.subr.mxu0 0.0
        %703 = vmatpush1.xpose.msra.mxu0 0.0
        %704 = vmatprep.subr.mxu0 0.0
        %705 = vmatpush1.xpose.msra.mxu0 0.0
        %706 = vmatprep.subr.mxu0 0.0
        %707 = vmatpush1.xpose.msra.mxu0 0.0
        %708 = vmatprep.subr.mxu0 0.0
        %709 = vmatpush1.xpose.msra.mxu0 0.0
        %710 = vmatprep.subr.mxu0 0.0
        %711 = vmatpush1.xpose.msra.mxu0 0.0
        %712 = vmatprep.subr.mxu0 0.0
        %713 = vmatpush1.xpose.msra.mxu0 0.0
        %714 = vmatprep.subr.mxu0 0.0
        %715 = vmatpush1.xpose.msra.mxu0 0.0
        %716 = vmatprep.subr.mxu0 0.0
        %717 = vmatpush1.xpose.msra.mxu0 0.0
        %718 = vmatprep.subr.mxu0 0.0
        %719 = vmatpush1.xpose.msra.mxu0 0.0
        %720 = vmatprep.subr.mxu0 0.0
        %721 = vmatpush1.xpose.msra.mxu0 0.0
        %722 = vmatprep.subr.mxu0 0.0
        %723 = vmatpush1.xpose.msra.mxu0 0.0
        %724 = vmatprep.subr.mxu0 0.0
        %725 = vmatpush1.xpose.msra.mxu0 0.0
        %726 = vmatprep.subr.mxu0 0.0
        %727 = vmatpush1.xpose.msra.mxu0 0.0
        %728 = vmatprep.subr.mxu0 0.0
        %729 = vmatpush1.xpose.msra.mxu0 0.0
        %730 = vmatprep.subr.mxu0 0.0
        %731 = vmatpush1.xpose.msra.mxu0 0.0
        %732 = vmatprep.subr.mxu0 0.0
        %733 = vmatpush1.xpose.msra.mxu0 0.0
        %734 = vmatprep.subr.mxu0 0.0
        %735 = vmatpush1.xpose.msra.mxu0 0.0
        %736 = vmatprep.subr.mxu0 0.0
        %737 = vmatpush1.xpose.msra.mxu0 0.0
        %738 = vmatprep.subr.mxu0 0.0
        %739 = vmatpush1.xpose.msra.mxu0 0.0
        %740 = vmatprep.subr.mxu0 0.0
        %741 = vmatpush1.xpose.msra.mxu0 0.0
        %742 = vmatprep.subr.mxu0 0.0
        %743 = vmatpush1.xpose.msra.mxu0 0.0
        %744 = vmatprep.subr.mxu0 0.0
        %745 = vmatpush1.xpose.msra.mxu0 0.0
        %746 = vmatprep.subr.mxu0 0.0
        %747 = vmatpush1.xpose.msra.mxu0 0.0
        %748 = vmatprep.subr.mxu0 0.0
        %749 = vmatpush1.xpose.msra.mxu0 0.0
        %750 = vmatprep.subr.mxu0 0.0
        %751 = vmatpush1.xpose.msra.mxu0 0.0
        %752 = vmatprep.subr.mxu0 0.0
        %753 = vmatpush1.xpose.msra.mxu0 0.0
        %754 = vmatprep.subr.mxu0 0.0
        %755 = vmatpush1.xpose.msra.mxu0 0.0
        %756 = vmatprep.mubr.f32.mxu0 0.0
        %757 = vmatmul.mubr.f32.gmra.mrb[0].mxu0 %v688
        %v758 = vpop.f32.mrb[0].mxu0
        %v759 = vadd.f32 0.0, %v758
        %v760 = vpop.f32.mrb[0].mxu0
        %761 = vdwg.mxu0
        %v762 = vmul.f32 %v683, 0.35355338
        %v763 = vmul.f32 %v759, 0.35355338
        %v764 = vadd.f32 %v762, %v525
        %v765 = vadd.f32 %v763, %v525
        %v766 = vsel %vm611, %v764, -inf
        %767 = vmax.xlane.f32.xlu0 %v766
        %v768 = vpop.xlane.xlu0 %767
        %v769 = vsel %vm611, %v765, -inf
        %770 = vmax.xlane.f32.xlu0 %v769
        %v771 = vpop.xlane.xlu0 %770
        %v772 = vsub.f32 %v764, %v768
        %v773 = vsub.f32 %v765, %v771
        %v774 = vmul.f32 %v772, 1.442695
        %v775 = vpow.pop %v774
        %v776 = vmul.f32 %v773, 1.442695
        %v777 = vpow.pop %v776
        %v778 = vsel %vm611, %v775, 0.0
        %779 = vadd.xlane.f32.xlu0 %v778
        %v780 = vpop.xlane.xlu0 %779
        %v781 = vsel %vm611, %v777, 0.0
        %782 = vadd.xlane.f32.xlu0 %v781
        %v783 = vpop.xlane.xlu0 %782
        %v784 = vrcp.pop %v780
        %v785 = vrcp.pop %v783
        %v786 = vmul.f32 %v775, %v784
        %v787 = vmul.f32 %v777, %v785
        %788 = vrot.lane.b32.xlu0 %v603, 96
        %v789 = vpop.permute.xlu0 %788
        %v792 = vsel %vm611, %v786, 0
        %794 = vmatprep.subr.mxu0 0.0
        %795 = vmatpush1.msra.mxu0 %v789
        %796 = vmatprep.subr.mxu0 0.0
        %797 = vmatpush1.msra.mxu0 0.0
        %798 = vmatprep.subr.mxu0 0.0
        %799 = vmatpush1.msra.mxu0 0.0
        %800 = vmatprep.subr.mxu0 0.0
        %801 = vmatpush1.msra.mxu0 0.0
        %802 = vmatprep.subr.mxu0 0.0
        %803 = vmatpush1.msra.mxu0 0.0
        %804 = vmatprep.subr.mxu0 0.0
        %805 = vmatpush1.msra.mxu0 0.0
        %806 = vmatprep.subr.mxu0 0.0
        %807 = vmatpush1.msra.mxu0 0.0
        %808 = vmatprep.subr.mxu0 0.0
        %809 = vmatpush1.msra.mxu0 0.0
        %810 = vmatprep.subr.mxu0 0.0
        %811 = vmatpush1.msra.mxu0 0.0
        %812 = vmatprep.subr.mxu0 0.0
        %813 = vmatpush1.msra.mxu0 0.0
        %814 = vmatprep.subr.mxu0 0.0
        %815 = vmatpush1.msra.mxu0 0.0
        %816 = vmatprep.subr.mxu0 0.0
        %817 = vmatpush1.msra.mxu0 0.0
        %818 = vmatprep.subr.mxu0 0.0
        %819 = vmatpush1.msra.mxu0 0.0
        %820 = vmatprep.subr.mxu0 0.0
        %821 = vmatpush1.msra.mxu0 0.0
        %822 = vmatprep.subr.mxu0 0.0
        %823 = vmatpush1.msra.mxu0 0.0
        %824 = vmatprep.subr.mxu0 0.0
        %825 = vmatpush1.msra.mxu0 0.0
        %826 = vmatprep.subr.mxu0 0.0
        %827 = vmatpush1.msra.mxu0 0.0
        %828 = vmatprep.subr.mxu0 0.0
        %829 = vmatpush1.msra.mxu0 0.0
        %830 = vmatprep.subr.mxu0 0.0
        %831 = vmatpush1.msra.mxu0 0.0
        %832 = vmatprep.subr.mxu0 0.0
        %833 = vmatpush1.msra.mxu0 0.0
        %834 = vmatprep.subr.mxu0 0.0
        %835 = vmatpush1.msra.mxu0 0.0
        %836 = vmatprep.subr.mxu0 0.0
        %837 = vmatpush1.msra.mxu0 0.0
        %838 = vmatprep.subr.mxu0 0.0
        %839 = vmatpush1.msra.mxu0 0.0
        %840 = vmatprep.subr.mxu0 0.0
        %841 = vmatpush1.msra.mxu0 0.0
        %842 = vmatprep.subr.mxu0 0.0
        %843 = vmatpush1.msra.mxu0 0.0
        %844 = vmatprep.subr.mxu0 0.0
        %845 = vmatpush1.msra.mxu0 0.0
        %846 = vmatprep.subr.mxu0 0.0
        %847 = vmatpush1.msra.mxu0 0.0
        %848 = vmatprep.subr.mxu0 0.0
        %849 = vmatpush1.msra.mxu0 0.0
        %850 = vmatprep.subr.mxu0 0.0
        %851 = vmatpush1.msra.mxu0 0.0
        %852 = vmatprep.subr.mxu0 0.0
        %853 = vmatpush1.msra.mxu0 0.0
        %854 = vmatprep.subr.mxu0 0.0
        %855 = vmatpush1.msra.mxu0 0.0
        %856 = vmatprep.subr.mxu0 0.0
        %857 = vmatpush1.msra.mxu0 0.0
        %858 = vmatprep.mubr.f32.mxu0 0.0
        %859 = vmatmul.mubr.f32.gmra.mrb[0].mxu0 %v792
        %v860 = vpop.f32.mrb[0].mxu0
        %v861 = vadd.f32 0.0, %v860
        %v862 = vpop.f32.mrb[0].mxu0
        %863 = vdwg.mxu0
        %864 = vrot.lane.b32.xlu0 %v608, 96
        %v865 = vpop.permute.xlu0 %864
        %v868 = vsel %vm611, %v787, 0
        %870 = vmatprep.subr.mxu0 0.0
        %871 = vmatpush1.msra.mxu0 %v865
        %872 = vmatprep.subr.mxu0 0.0
        %873 = vmatpush1.msra.mxu0 0.0
        %874 = vmatprep.subr.mxu0 0.0
        %875 = vmatpush1.msra.mxu0 0.0
        %876 = vmatprep.subr.mxu0 0.0
        %877 = vmatpush1.msra.mxu0 0.0
        %878 = vmatprep.subr.mxu0 0.0
        %879 = vmatpush1.msra.mxu0 0.0
        %880 = vmatprep.subr.mxu0 0.0
        %881 = vmatpush1.msra.mxu0 0.0
        %882 = vmatprep.subr.mxu0 0.0
        %883 = vmatpush1.msra.mxu0 0.0
        %884 = vmatprep.subr.mxu0 0.0
        %885 = vmatpush1.msra.mxu0 0.0
        %886 = vmatprep.subr.mxu0 0.0
        %887 = vmatpush1.msra.mxu0 0.0
        %888 = vmatprep.subr.mxu0 0.0
        %889 = vmatpush1.msra.mxu0 0.0
        %890 = vmatprep.subr.mxu0 0.0
        %891 = vmatpush1.msra.mxu0 0.0
        %892 = vmatprep.subr.mxu0 0.0
        %893 = vmatpush1.msra.mxu0 0.0
        %894 = vmatprep.subr.mxu0 0.0
        %895 = vmatpush1.msra.mxu0 0.0
        %896 = vmatprep.subr.mxu0 0.0
        %897 = vmatpush1.msra.mxu0 0.0
        %898 = vmatprep.subr.mxu0 0.0
        %899 = vmatpush1.msra.mxu0 0.0
        %900 = vmatprep.subr.mxu0 0.0
        %901 = vmatpush1.msra.mxu0 0.0
        %902 = vmatprep.subr.mxu0 0.0
        %903 = vmatpush1.msra.mxu0 0.0
        %904 = vmatprep.subr.mxu0 0.0
        %905 = vmatpush1.msra.mxu0 0.0
        %906 = vmatprep.subr.mxu0 0.0
        %907 = vmatpush1.msra.mxu0 0.0
        %908 = vmatprep.subr.mxu0 0.0
        %909 = vmatpush1.msra.mxu0 0.0
        %910 = vmatprep.subr.mxu0 0.0
        %911 = vmatpush1.msra.mxu0 0.0
        %912 = vmatprep.subr.mxu0 0.0
        %913 = vmatpush1.msra.mxu0 0.0
        %914 = vmatprep.subr.mxu0 0.0
        %915 = vmatpush1.msra.mxu0 0.0
        %916 = vmatprep.subr.mxu0 0.0
        %917 = vmatpush1.msra.mxu0 0.0
        %918 = vmatprep.subr.mxu0 0.0
        %919 = vmatpush1.msra.mxu0 0.0
        %920 = vmatprep.subr.mxu0 0.0
        %921 = vmatpush1.msra.mxu0 0.0
        %922 = vmatprep.subr.mxu0 0.0
        %923 = vmatpush1.msra.mxu0 0.0
        %924 = vmatprep.subr.mxu0 0.0
        %925 = vmatpush1.msra.mxu0 0.0
        %926 = vmatprep.subr.mxu0 0.0
        %927 = vmatpush1.msra.mxu0 0.0
        %928 = vmatprep.subr.mxu0 0.0
        %929 = vmatpush1.msra.mxu0 0.0
        %930 = vmatprep.subr.mxu0 0.0
        %931 = vmatpush1.msra.mxu0 0.0
        %932 = vmatprep.subr.mxu0 0.0
        %933 = vmatpush1.msra.mxu0 0.0
        %934 = vmatprep.mubr.f32.mxu0 0.0
        %935 = vmatmul.mubr.f32.gmra.mrb[0].mxu0 %v868
        %v936 = vpop.f32.mrb[0].mxu0
        %v937 = vadd.f32 0.0, %v936
        %v938 = vpop.f32.mrb[0].mxu0
        %939 = vdwg.mxu0
        %941 = vrot.lane.b32.xlu0 %v937, 8
        %v942 = vpop.permute.xlu0 %941
        %v944 = vsel %vm611, %v861, %v942
        %vm945 = vcmask 130048
        %v947 = vsel %vm945, %v944, 0
        %949 = vmatprep.subr.mxu0 0.0
        %950 = vmatpush1.msra.mxu0 %v530
        %951 = vmatprep.subr.mxu0 0.0
        %952 = vmatpush1.msra.mxu0 %v531
        %953 = vmatprep.subr.mxu0 0.0
        %954 = vmatpush1.msra.mxu0 0.0
        %955 = vmatprep.subr.mxu0 0.0
        %956 = vmatpush1.msra.mxu0 0.0
        %957 = vmatprep.subr.mxu0 0.0
        %958 = vmatpush1.msra.mxu0 0.0
        %959 = vmatprep.subr.mxu0 0.0
        %960 = vmatpush1.msra.mxu0 0.0
        %961 = vmatprep.subr.mxu0 0.0
        %962 = vmatpush1.msra.mxu0 0.0
        %963 = vmatprep.subr.mxu0 0.0
        %964 = vmatpush1.msra.mxu0 0.0
        %965 = vmatprep.subr.mxu0 0.0
        %966 = vmatpush1.msra.mxu0 0.0
        %967 = vmatprep.subr.mxu0 0.0
        %968 = vmatpush1.msra.mxu0 0.0
        %969 = vmatprep.subr.mxu0 0.0
        %970 = vmatpush1.msra.mxu0 0.0
        %971 = vmatprep.subr.mxu0 0.0
        %972 = vmatpush1.msra.mxu0 0.0
        %973 = vmatprep.subr.mxu0 0.0
        %974 = vmatpush1.msra.mxu0 0.0
        %975 = vmatprep.subr.mxu0 0.0
        %976 = vmatpush1.msra.mxu0 0.0
        %977 = vmatprep.subr.mxu0 0.0
        %978 = vmatpush1.msra.mxu0 0.0
        %979 = vmatprep.subr.mxu0 0.0
        %980 = vmatpush1.msra.mxu0 0.0
        %981 = vmatprep.subr.mxu0 0.0
        %982 = vmatpush1.msra.mxu0 0.0
        %983 = vmatprep.subr.mxu0 0.0
        %984 = vmatpush1.msra.mxu0 0.0
        %985 = vmatprep.subr.mxu0 0.0
        %986 = vmatpush1.msra.mxu0 0.0
        %987 = vmatprep.subr.mxu0 0.0
        %988 = vmatpush1.msra.mxu0 0.0
        %989 = vmatprep.subr.mxu0 0.0
        %990 = vmatpush1.msra.mxu0 0.0
        %991 = vmatprep.subr.mxu0 0.0
        %992 = vmatpush1.msra.mxu0 0.0
        %993 = vmatprep.subr.mxu0 0.0
        %994 = vmatpush1.msra.mxu0 0.0
        %995 = vmatprep.subr.mxu0 0.0
        %996 = vmatpush1.msra.mxu0 0.0
        %997 = vmatprep.subr.mxu0 0.0
        %998 = vmatpush1.msra.mxu0 0.0
        %999 = vmatprep.subr.mxu0 0.0
        %1000 = vmatpush1.msra.mxu0 0.0
        %1001 = vmatprep.subr.mxu0 0.0
        %1002 = vmatpush1.msra.mxu0 0.0
        %1003 = vmatprep.subr.mxu0 0.0
        %1004 = vmatpush1.msra.mxu0 0.0
        %1005 = vmatprep.subr.mxu0 0.0
        %1006 = vmatpush1.msra.mxu0 0.0
        %1007 = vmatprep.subr.mxu0 0.0
        %1008 = vmatpush1.msra.mxu0 0.0
        %1009 = vmatprep.subr.mxu0 0.0
        %1010 = vmatpush1.msra.mxu0 0.0
        %1011 = vmatprep.subr.mxu0 0.0
        %1012 = vmatpush1.msra.mxu0 0.0
        %1013 = vmatprep.mubr.f32.mxu0 0.0
        %1014 = vmatmul.mubr.f32.gmra.mrb[0].mxu0 %v947
        %v1015 = vpop.f32.mrb[0].mxu0
        %v1016 = vadd.f32 %v522, %v1015
        %v1017 = vpop.f32.mrb[0].mxu0
        %1018 = vdwg.mxu0
        %v1019 = vsel %vm532, %v1016, 0.0
        %1020 = vadd.xlane.f32.xlu0 %v1019
        %v1021 = vpop.xlane.xlu0 %1020
        %v1022 = vrcp.pop 32.0
        %v1023 = vmul.f32 %v1021, %v1022
        %v1024 = vsub.f32 %v1016, %v1023
        %v1025 = vmul.f32 %v1024, %v1024
        %v1026 = vsel %vm532, %v1025, 0.0
        %1027 = vadd.xlane.f32.xlu0 %v1026
        %v1028 = vpop.xlane.xlu0 %1027
        %v1029 = vmul.f32 %v1028, %v1022
        %v1030 = vadd.f32 %v1029, 1e-05
        %v1031 = vrsqrt.pop %v1030
        %v1032 = vmul.f32 %v1024, %v1031
        %v1033 = vld [vmem:[%s455] sm:$0xff]
        %v1034 = vld [vmem:[%s6] sm:$0xff]
        %v1035 = vld [vmem:[%s6 + $0x8] sm:$0xff]
        %v1036 = vld [vmem:[%s6 + $0x10] sm:$0xff]
        %v1037 = vld [vmem:[%s6 + $0x18] sm:$0xff]
        %v1038 = vld [vmem:[%s7] sm:$0xff]
        %v1039 = vld [vmem:[%s7 + $0x8] sm:$0xff]
        %v1040 = vld [vmem:[%s7 + $0x10] sm:$0xff]
        %v1041 = vld [vmem:[%s7 + $0x18] sm:$0xff]
        %v1042 = vld [vmem:[#allocation10] sm:$0xff]
        %v1043 = vld [vmem:[#allocation10 + $0x8] sm:$0xff]
        %v1045 = vsel %vm532, %v1032, 0
        %1047 = vmatprep.subr.mxu0 0.0
        %1048 = vmatpush1.msra.mxu0 %v1034
        %1049 = vmatprep.subr.mxu0 0.0
        %1050 = vmatpush1.msra.mxu0 %v1035
        %1051 = vmatprep.subr.mxu0 0.0
        %1052 = vmatpush1.msra.mxu0 %v1036
        %1053 = vmatprep.subr.mxu0 0.0
        %1054 = vmatpush1.msra.mxu0 %v1037
        %1055 = vmatprep.subr.mxu0 0.0
        %1056 = vmatpush1.msra.mxu0 0.0
        %1057 = vmatprep.subr.mxu0 0.0
        %1058 = vmatpush1.msra.mxu0 0.0
        %1059 = vmatprep.subr.mxu0 0.0
        %1060 = vmatpush1.msra.mxu0 0.0
        %1061 = vmatprep.subr.mxu0 0.0
        %1062 = vmatpush1.msra.mxu0 0.0
        %1063 = vmatprep.subr.mxu0 0.0
        %1064 = vmatpush1.msra.mxu0 0.0
        %1065 = vmatprep.subr.mxu0 0.0
        %1066 = vmatpush1.msra.mxu0 0.0
        %1067 = vmatprep.subr.mxu0 0.0
        %1068 = vmatpush1.msra.mxu0 0.0
        %1069 = vmatprep.subr.mxu0 0.0
        %1070 = vmatpush1.msra.mxu0 0.0
        %1071 = vmatprep.subr.mxu0 0.0
        %1072 = vmatpush1.msra.mxu0 0.0
        %1073 = vmatprep.subr.mxu0 0.0
        %1074 = vmatpush1.msra.mxu0 0.0
        %1075 = vmatprep.subr.mxu0 0.0
        %1076 = vmatpush1.msra.mxu0 0.0
        %1077 = vmatprep.subr.mxu0 0.0
        %1078 = vmatpush1.msra.mxu0 0.0
        %1079 = vmatprep.subr.mxu0 0.0
        %1080 = vmatpush1.msra.mxu0 0.0
        %1081 = vmatprep.subr.mxu0 0.0
        %1082 = vmatpush1.msra.mxu0 0.0
        %1083 = vmatprep.subr.mxu0 0.0
        %1084 = vmatpush1.msra.mxu0 0.0
        %1085 = vmatprep.subr.mxu0 0.0
        %1086 = vmatpush1.msra.mxu0 0.0
        %1087 = vmatprep.subr.mxu0 0.0
        %1088 = vmatpush1.msra.mxu0 0.0
        %1089 = vmatprep.subr.mxu0 0.0
        %1090 = vmatpush1.msra.mxu0 0.0
        %1091 = vmatprep.subr.mxu0 0.0
        %1092 = vmatpush1.msra.mxu0 0.0
        %1093 = vmatprep.subr.mxu0 0.0
        %1094 = vmatpush1.msra.mxu0 0.0
        %1095 = vmatprep.subr.mxu0 0.0
        %1096 = vmatpush1.msra.mxu0 0.0
        %1097 = vmatprep.subr.mxu0 0.0
        %1098 = vmatpush1.msra.mxu0 0.0
        %1099 = vmatprep.subr.mxu0 0.0
        %1100 = vmatpush1.msra.mxu0 0.0
        %1101 = vmatprep.subr.mxu0 0.0
        %1102 = vmatpush1.msra.mxu0 0.0
        %1103 = vmatprep.subr.mxu0 0.0
        %1104 = vmatpush1.msra.mxu0 0.0
        %1105 = vmatprep.subr.mxu0 0.0
        %1106 = vmatpush1.msra.mxu0 0.0
        %1107 = vmatprep.subr.mxu0 0.0
        %1108 = vmatpush1.msra.mxu0 0.0
        %1109 = vmatprep.subr.mxu0 0.0
        %1110 = vmatpush1.msra.mxu0 0.0
        %1111 = vmatprep.mubr.f32.mxu0 0.0
        %1112 = vmatmul.mubr.f32.gmra.mrb[0].mxu0 %v1045
        %v1113 = vpop.f32.mrb[0].mxu0
        %v1114 = vadd.f32 0.0, %v1113
        %v1115 = vpop.f32.mrb[0].mxu0
        %1116 = vdwg.mxu0
        %v1118 = vsel %vm532, %v523, 0
        %v1121 = vsel %vm532, %v524, 0
        %1123 = vmatprep.subr.mxu0 0.0
        %1124 = vmatpush1.msra.mxu0 %v1038
        %1125 = vmatprep.subr.mxu0 0.0
        %1126 = vmatpush1.msra.mxu0 %v1039
        %1127 = vmatprep.subr.mxu0 0.0
        %1128 = vmatpush1.msra.mxu0 %v1040
        %1129 = vmatprep.subr.mxu0 0.0
        %1130 = vmatpush1.msra.mxu0 %v1041
        %1131 = vmatprep.subr.mxu0 0.0
        %1132 = vmatpush1.msra.mxu0 0.0
        %1133 = vmatprep.subr.mxu0 0.0
        %1134 = vmatpush1.msra.mxu0 0.0
        %1135 = vmatprep.subr.mxu0 0.0
        %1136 = vmatpush1.msra.mxu0 0.0
        %1137 = vmatprep.subr.mxu0 0.0
        %1138 = vmatpush1.msra.mxu0 0.0
        %1139 = vmatprep.subr.mxu0 0.0
        %1140 = vmatpush1.msra.mxu0 0.0
        %1141 = vmatprep.subr.mxu0 0.0
        %1142 = vmatpush1.msra.mxu0 0.0
        %1143 = vmatprep.subr.mxu0 0.0
        %1144 = vmatpush1.msra.mxu0 0.0
        %1145 = vmatprep.subr.mxu0 0.0
        %1146 = vmatpush1.msra.mxu0 0.0
        %1147 = vmatprep.subr.mxu0 0.0
        %1148 = vmatpush1.msra.mxu0 0.0
        %1149 = vmatprep.subr.mxu0 0.0
        %1150 = vmatpush1.msra.mxu0 0.0
        %1151 = vmatprep.subr.mxu0 0.0
        %1152 = vmatpush1.msra.mxu0 0.0
        %1153 = vmatprep.subr.mxu0 0.0
        %1154 = vmatpush1.msra.mxu0 0.0
        %1155 = vmatprep.subr.mxu0 0.0
        %1156 = vmatpush1.msra.mxu0 0.0
        %1157 = vmatprep.subr.mxu0 0.0
        %1158 = vmatpush1.msra.mxu0 0.0
        %1159 = vmatprep.subr.mxu0 0.0
        %1160 = vmatpush1.msra.mxu0 0.0
        %1161 = vmatprep.subr.mxu0 0.0
        %1162 = vmatpush1.msra.mxu0 0.0
        %1163 = vmatprep.subr.mxu0 0.0
        %1164 = vmatpush1.msra.mxu0 0.0
        %1165 = vmatprep.subr.mxu0 0.0
        %1166 = vmatpush1.msra.mxu0 0.0
        %1167 = vmatprep.subr.mxu0 0.0
        %1168 = vmatpush1.msra.mxu0 0.0
        %1169 = vmatprep.subr.mxu0 0.0
        %1170 = vmatpush1.msra.mxu0 0.0
        %1171 = vmatprep.subr.mxu0 0.0
        %1172 = vmatpush1.msra.mxu0 0.0
        %1173 = vmatprep.subr.mxu0 0.0
        %1174 = vmatpush1.msra.mxu0 0.0
        %1175 = vmatprep.subr.mxu0 0.0
        %1176 = vmatpush1.msra.mxu0 0.0
        %1177 = vmatprep.subr.mxu0 0.0
        %1178 = vmatpush1.msra.mxu0 0.0
        %1179 = vmatprep.subr.mxu0 0.0
        %1180 = vmatpush1.msra.mxu0 0.0
        %1181 = vmatprep.subr.mxu0 0.0
        %1182 = vmatpush1.msra.mxu0 0.0
        %1183 = vmatprep.subr.mxu0 0.0
        %1184 = vmatpush1.msra.mxu0 0.0
        %1185 = vmatprep.subr.mxu0 0.0
        %1186 = vmatpush1.msra.mxu0 0.0
        %1187 = vmatprep.mubr.f32.mxu0 0.0
        %1188 = vmatmul.mubr.f32.gmra.mrb[0].mxu0 %v1118
        %v1189 = vpop.f32.mrb[0].mxu0
        %v1190 = vadd.f32 0.0, %v1189
        %v1191 = vpop.f32.mrb[0].mxu0
        %1192 = vmatprep.mubr.f32.mxu0 0.0
        %1193 = vmatmul.mubr.f32.gmra.mrb[0].mxu0 %v1121
        %v1194 = vpop.f32.mrb[0].mxu0
        %v1195 = vadd.f32 0.0, %v1194
        %v1196 = vpop.f32.mrb[0].mxu0
        %1197 = vdwg.mxu0
        %1199 = vrot.lane.b32.xlu0 %v1114, 120
        %v1200 = vpop.permute.xlu0 %1199
        %1203 = vrot.lane.b32.xlu0 %v1190, 120
        %v1204 = vpop.permute.xlu0 %1203
        %1205 = vrot.lane.b32.xlu0 %v1195, 120
        %v1206 = vpop.permute.xlu0 %1205
        %v1207 = vsel %vm611, %v1114, 0
        %v1209 = vsel %vm611, %v1190, 0
        %v1211 = vsel %vm611, %v1195, 0
        %1213 = vmatprep.subr.mxu0 0.0
        %1214 = vmatpush1.xpose.msra.mxu0 %v1209
        %1215 = vmatprep.subr.mxu0 0.0
        %1216 = vmatpush1.xpose.msra.mxu0 %v1211
        %1217 = vmatprep.subr.mxu0 0.0
        %1218 = vmatpush1.xpose.msra.mxu0 0.0
        %1219 = vmatprep.subr.mxu0 0.0
        %1220 = vmatpush1.xpose.msra.mxu0 0.0
        %1221 = vmatprep.subr.mxu0 0.0
        %1222 = vmatpush1.xpose.msra.mxu0 0.0
        %1223 = vmatprep.subr.mxu0 0.0
        %1224 = vmatpush1.xpose.msra.mxu0 0.0
        %1225 = vmatprep.subr.mxu0 0.0
        %1226 = vmatpush1.xpose.msra.mxu0 0.0
        %1227 = vmatprep.subr.mxu0 0.0
        %1228 = vmatpush1.xpose.msra.mxu0 0.0
        %1229 = vmatprep.subr.mxu0 0.0
        %1230 = vmatpush1.xpose.msra.mxu0 0.0
        %1231 = vmatprep.subr.mxu0 0.0
        %1232 = vmatpush1.xpose.msra.mxu0 0.0
        %1233 = vmatprep.subr.mxu0 0.0
        %1234 = vmatpush1.xpose.msra.mxu0 0.0
        %1235 = vmatprep.subr.mxu0 0.0
        %1236 = vmatpush1.xpose.msra.mxu0 0.0
        %1237 = vmatprep.subr.mxu0 0.0
        %1238 = vmatpush1.xpose.msra.mxu0 0.0
        %1239 = vmatprep.subr.mxu0 0.0
        %1240 = vmatpush1.xpose.msra.mxu0 0.0
        %1241 = vmatprep.subr.mxu0 0.0
        %1242 = vmatpush1.xpose.msra.mxu0 0.0
        %1243 = vmatprep.subr.mxu0 0.0
        %1244 = vmatpush1.xpose.msra.mxu0 0.0
        %1245 = vmatprep.subr.mxu0 0.0
        %1246 = vmatpush1.xpose.msra.mxu0 0.0
        %1247 = vmatprep.subr.mxu0 0.0
        %1248 = vmatpush1.xpose.msra.mxu0 0.0
        %1249 = vmatprep.subr.mxu0 0.0
        %1250 = vmatpush1.xpose.msra.mxu0 0.0
        %1251 = vmatprep.subr.mxu0 0.0
        %1252 = vmatpush1.xpose.msra.mxu0 0.0
        %1253 = vmatprep.subr.mxu0 0.0
        %1254 = vmatpush1.xpose.msra.mxu0 0.0
        %1255 = vmatprep.subr.mxu0 0.0
        %1256 = vmatpush1.xpose.msra.mxu0 0.0
        %1257 = vmatprep.subr.mxu0 0.0
        %1258 = vmatpush1.xpose.msra.mxu0 0.0
        %1259 = vmatprep.subr.mxu0 0.0
        %1260 = vmatpush1.xpose.msra.mxu0 0.0
        %1261 = vmatprep.subr.mxu0 0.0
        %1262 = vmatpush1.xpose.msra.mxu0 0.0
        %1263 = vmatprep.subr.mxu0 0.0
        %1264 = vmatpush1.xpose.msra.mxu0 0.0
        %1265 = vmatprep.subr.mxu0 0.0
        %1266 = vmatpush1.xpose.msra.mxu0 0.0
        %1267 = vmatprep.subr.mxu0 0.0
        %1268 = vmatpush1.xpose.msra.mxu0 0.0
        %1269 = vmatprep.subr.mxu0 0.0
        %1270 = vmatpush1.xpose.msra.mxu0 0.0
        %1271 = vmatprep.subr.mxu0 0.0
        %1272 = vmatpush1.xpose.msra.mxu0 0.0
        %1273 = vmatprep.subr.mxu0 0.0
        %1274 = vmatpush1.xpose.msra.mxu0 0.0
        %1275 = vmatprep.subr.mxu0 0.0
        %1276 = vmatpush1.xpose.msra.mxu0 0.0
        %1277 = vmatprep.mubr.f32.mxu0 0.0
        %1278 = vmatmul.mubr.f32.gmra.mrb[0].mxu0 %v1207
        %v1279 = vpop.f32.mrb[0].mxu0
        %v1280 = vadd.f32 0.0, %v1279
        %v1281 = vpop.f32.mrb[0].mxu0
        %1282 = vdwg.mxu0
        %v1283 = vsel %vm611, %v1200, 0
        %v1285 = vsel %vm611, %v1204, 0
        %v1287 = vsel %vm611, %v1206, 0
        %1289 = vmatprep.subr.mxu0 0.0
        %1290 = vmatpush1.xpose.msra.mxu0 %v1285
        %1291 = vmatprep.subr.mxu0 0.0
        %1292 = vmatpush1.xpose.msra.mxu0 %v1287
        %1293 = vmatprep.subr.mxu0 0.0
        %1294 = vmatpush1.xpose.msra.mxu0 0.0
        %1295 = vmatprep.subr.mxu0 0.0
        %1296 = vmatpush1.xpose.msra.mxu0 0.0
        %1297 = vmatprep.subr.mxu0 0.0
        %1298 = vmatpush1.xpose.msra.mxu0 0.0
        %1299 = vmatprep.subr.mxu0 0.0
        %1300 = vmatpush1.xpose.msra.mxu0 0.0
        %1301 = vmatprep.subr.mxu0 0.0
        %1302 = vmatpush1.xpose.msra.mxu0 0.0
        %1303 = vmatprep.subr.mxu0 0.0
        %1304 = vmatpush1.xpose.msra.mxu0 0.0
        %1305 = vmatprep.subr.mxu0 0.0
        %1306 = vmatpush1.xpose.msra.mxu0 0.0
        %1307 = vmatprep.subr.mxu0 0.0
        %1308 = vmatpush1.xpose.msra.mxu0 0.0
        %1309 = vmatprep.subr.mxu0 0.0
        %1310 = vmatpush1.xpose.msra.mxu0 0.0
        %1311 = vmatprep.subr.mxu0 0.0
        %1312 = vmatpush1.xpose.msra.mxu0 0.0
        %1313 = vmatprep.subr.mxu0 0.0
        %1314 = vmatpush1.xpose.msra.mxu0 0.0
        %1315 = vmatprep.subr.mxu0 0.0
        %1316 = vmatpush1.xpose.msra.mxu0 0.0
        %1317 = vmatprep.subr.mxu0 0.0
        %1318 = vmatpush1.xpose.msra.mxu0 0.0
        %1319 = vmatprep.subr.mxu0 0.0
        %1320 = vmatpush1.xpose.msra.mxu0 0.0
        %1321 = vmatprep.subr.mxu0 0.0
        %1322 = vmatpush1.xpose.msra.mxu0 0.0
        %1323 = vmatprep.subr.mxu0 0.0
        %1324 = vmatpush1.xpose.msra.mxu0 0.0
        %1325 = vmatprep.subr.mxu0 0.0
        %1326 = vmatpush1.xpose.msra.mxu0 0.0
        %1327 = vmatprep.subr.mxu0 0.0
        %1328 = vmatpush1.xpose.msra.mxu0 0.0
        %1329 = vmatprep.subr.mxu0 0.0
        %1330 = vmatpush1.xpose.msra.mxu0 0.0
        %1331 = vmatprep.subr.mxu0 0.0
        %1332 = vmatpush1.xpose.msra.mxu0 0.0
        %1333 = vmatprep.subr.mxu0 0.0
        %1334 = vmatpush1.xpose.msra.mxu0 0.0
        %1335 = vmatprep.subr.mxu0 0.0
        %1336 = vmatpush1.xpose.msra.mxu0 0.0
        %1337 = vmatprep.subr.mxu0 0.0
        %1338 = vmatpush1.xpose.msra.mxu0 0.0
        %1339 = vmatprep.subr.mxu0 0.0
        %1340 = vmatpush1.xpose.msra.mxu0 0.0
        %1341 = vmatprep.subr.mxu0 0.0
        %1342 = vmatpush1.xpose.msra.mxu0 0.0
        %1343 = vmatprep.subr.mxu0 0.0
        %1344 = vmatpush1.xpose.msra.mxu0 0.0
        %1345 = vmatprep.subr.mxu0 0.0
        %1346 = vmatpush1.xpose.msra.mxu0 0.0
        %1347 = vmatprep.subr.mxu0 0.0
        %1348 = vmatpush1.xpose.msra.mxu0 0.0
        %1349 = vmatprep.subr.mxu0 0.0
        %1350 = vmatpush1.xpose.msra.mxu0 0.0
        %1351 = vmatprep.subr.mxu0 0.0
        %1352 = vmatpush1.xpose.msra.mxu0 0.0
        %1353 = vmatprep.mubr.f32.mxu0 0.0
        %1354 = vmatmul.mubr.f32.gmra.mrb[0].mxu0 %v1283
        %v1355 = vpop.f32.mrb[0].mxu0
        %v1356 = vadd.f32 0.0, %v1355
        %v1357 = vpop.f32.mrb[0].mxu0
        %1358 = vdwg.mxu0
        %v1359 = vmul.f32 %v1280, 0.35355338
        %v1360 = vmul.f32 %v1356, 0.35355338
        %v1361 = vadd.f32 %v1359, %v1033
        %v1362 = vadd.f32 %v1360, %v1033
        %v1363 = vsel %vm945, %v1361, -inf
        %1364 = vmax.xlane.f32.xlu0 %v1363
        %v1365 = vpop.xlane.xlu0 %1364
        %v1366 = vsel %vm945, %v1362, -inf
        %1367 = vmax.xlane.f32.xlu0 %v1366
        %v1368 = vpop.xlane.xlu0 %1367
        %v1369 = vsub.f32 %v1361, %v1365
        %v1370 = vsub.f32 %v1362, %v1368
        %v1371 = vmul.f32 %v1369, 1.442695
        %v1372 = vpow.pop %v1371
        %v1373 = vmul.f32 %v1370, 1.442695
        %v1374 = vpow.pop %v1373
        %v1375 = vsel %vm945, %v1372, 0.0
        %1376 = vadd.xlane.f32.xlu0 %v1375
        %v1377 = vpop.xlane.xlu0 %1376
        %v1378 = vsel %vm945, %v1374, 0.0
        %1379 = vadd.xlane.f32.xlu0 %v1378
        %v1380 = vpop.xlane.xlu0 %1379
        %v1381 = vrcp.pop %v1377
        %v1382 = vrcp.pop %v1380
        %v1383 = vmul.f32 %v1372, %v1381
        %v1384 = vmul.f32 %v1374, %v1382
        %1385 = vrot.lane.b32.xlu0 %v1190, 112
        %v1386 = vpop.permute.xlu0 %1385
        %1387 = vrot.lane.b32.xlu0 %v1195, 112
        %v1388 = vpop.permute.xlu0 %1387
        %v1392 = vsel %vm945, %v1383, 0
        %1394 = vmatprep.subr.mxu0 0.0
        %1395 = vmatpush1.msra.mxu0 %v1386
        %1396 = vmatprep.subr.mxu0 0.0
        %1397 = vmatpush1.msra.mxu0 %v1388
        %1398 = vmatprep.subr.mxu0 0.0
        %1399 = vmatpush1.msra.mxu0 0.0
        %1400 = vmatprep.subr.mxu0 0.0
        %1401 = vmatpush1.msra.mxu0 0.0
        %1402 = vmatprep.subr.mxu0 0.0
        %1403 = vmatpush1.msra.mxu0 0.0
        %1404 = vmatprep.subr.mxu0 0.0
        %1405 = vmatpush1.msra.mxu0 0.0
        %1406 = vmatprep.subr.mxu0 0.0
        %1407 = vmatpush1.msra.mxu0 0.0
        %1408 = vmatprep.subr.mxu0 0.0
        %1409 = vmatpush1.msra.mxu0 0.0
        %1410 = vmatprep.subr.mxu0 0.0
        %1411 = vmatpush1.msra.mxu0 0.0
        %1412 = vmatprep.subr.mxu0 0.0
        %1413 = vmatpush1.msra.mxu0 0.0
        %1414 = vmatprep.subr.mxu0 0.0
        %1415 = vmatpush1.msra.mxu0 0.0
        %1416 = vmatprep.subr.mxu0 0.0
        %1417 = vmatpush1.msra.mxu0 0.0
        %1418 = vmatprep.subr.mxu0 0.0
        %1419 = vmatpush1.msra.mxu0 0.0
        %1420 = vmatprep.subr.mxu0 0.0
        %1421 = vmatpush1.msra.mxu0 0.0
        %1422 = vmatprep.subr.mxu0 0.0
        %1423 = vmatpush1.msra.mxu0 0.0
        %1424 = vmatprep.subr.mxu0 0.0
        %1425 = vmatpush1.msra.mxu0 0.0
        %1426 = vmatprep.subr.mxu0 0.0
        %1427 = vmatpush1.msra.mxu0 0.0
        %1428 = vmatprep.subr.mxu0 0.0
        %1429 = vmatpush1.msra.mxu0 0.0
        %1430 = vmatprep.subr.mxu0 0.0
        %1431 = vmatpush1.msra.mxu0 0.0
        %1432 = vmatprep.subr.mxu0 0.0
        %1433 = vmatpush1.msra.mxu0 0.0
        %1434 = vmatprep.subr.mxu0 0.0
        %1435 = vmatpush1.msra.mxu0 0.0
        %1436 = vmatprep.subr.mxu0 0.0
        %1437 = vmatpush1.msra.mxu0 0.0
        %1438 = vmatprep.subr.mxu0 0.0
        %1439 = vmatpush1.msra.mxu0 0.0
        %1440 = vmatprep.subr.mxu0 0.0
        %1441 = vmatpush1.msra.mxu0 0.0
        %1442 = vmatprep.subr.mxu0 0.0
        %1443 = vmatpush1.msra.mxu0 0.0
        %1444 = vmatprep.subr.mxu0 0.0
        %1445 = vmatpush1.msra.mxu0 0.0
        %1446 = vmatprep.subr.mxu0 0.0
        %1447 = vmatpush1.msra.mxu0 0.0
        %1448 = vmatprep.subr.mxu0 0.0
        %1449 = vmatpush1.msra.mxu0 0.0
        %1450 = vmatprep.subr.mxu0 0.0
        %1451 = vmatpush1.msra.mxu0 0.0
        %1452 = vmatprep.subr.mxu0 0.0
        %1453 = vmatpush1.msra.mxu0 0.0
        %1454 = vmatprep.subr.mxu0 0.0
        %1455 = vmatpush1.msra.mxu0 0.0
        %1456 = vmatprep.subr.mxu0 0.0
        %1457 = vmatpush1.msra.mxu0 0.0
        %1458 = vmatprep.mubr.f32.mxu0 0.0
        %1459 = vmatmul.mubr.f32.gmra.mrb[0].mxu0 %v1392
        %v1460 = vpop.f32.mrb[0].mxu0
        %v1461 = vadd.f32 0.0, %v1460
        %v1462 = vpop.f32.mrb[0].mxu0
        %1463 = vdwg.mxu0
        %1464 = vrot.lane.b32.xlu0 %v1204, 112
        %v1465 = vpop.permute.xlu0 %1464
        %1466 = vrot.lane.b32.xlu0 %v1206, 112
        %v1467 = vpop.permute.xlu0 %1466
        %v1471 = vsel %vm945, %v1384, 0
        %1473 = vmatprep.subr.mxu0 0.0
        %1474 = vmatpush1.msra.mxu0 %v1465
        %1475 = vmatprep.subr.mxu0 0.0
        %1476 = vmatpush1.msra.mxu0 %v1467
        %1477 = vmatprep.subr.mxu0 0.0
        %1478 = vmatpush1.msra.mxu0 0.0
        %1479 = vmatprep.subr.mxu0 0.0
        %1480 = vmatpush1.msra.mxu0 0.0
        %1481 = vmatprep.subr.mxu0 0.0
        %1482 = vmatpush1.msra.mxu0 0.0
        %1483 = vmatprep.subr.mxu0 0.0
        %1484 = vmatpush1.msra.mxu0 0.0
        %1485 = vmatprep.subr.mxu0 0.0
        %1486 = vmatpush1.msra.mxu0 0.0
        %1487 = vmatprep.subr.mxu0 0.0
        %1488 = vmatpush1.msra.mxu0 0.0
        %1489 = vmatprep.subr.mxu0 0.0
        %1490 = vmatpush1.msra.mxu0 0.0
        %1491 = vmatprep.subr.mxu0 0.0
        %1492 = vmatpush1.msra.mxu0 0.0
        %1493 = vmatprep.subr.mxu0 0.0
        %1494 = vmatpush1.msra.mxu0 0.0
        %1495 = vmatprep.subr.mxu0 0.0
        %1496 = vmatpush1.msra.mxu0 0.0
        %1497 = vmatprep.subr.mxu0 0.0
        %1498 = vmatpush1.msra.mxu0 0.0
        %1499 = vmatprep.subr.mxu0 0.0
        %1500 = vmatpush1.msra.mxu0 0.0
        %1501 = vmatprep.subr.mxu0 0.0
        %1502 = vmatpush1.msra.mxu0 0.0
        %1503 = vmatprep.subr.mxu0 0.0
        %1504 = vmatpush1.msra.mxu0 0.0
        %1505 = vmatprep.subr.mxu0 0.0
        %1506 = vmatpush1.msra.mxu0 0.0
        %1507 = vmatprep.subr.mxu0 0.0
        %1508 = vmatpush1.msra.mxu0 0.0
        %1509 = vmatprep.subr.mxu0 0.0
        %1510 = vmatpush1.msra.mxu0 0.0
        %1511 = vmatprep.subr.mxu0 0.0
        %1512 = vmatpush1.msra.mxu0 0.0
        %1513 = vmatprep.subr.mxu0 0.0
        %1514 = vmatpush1.msra.mxu0 0.0
        %1515 = vmatprep.subr.mxu0 0.0
        %1516 = vmatpush1.msra.mxu0 0.0
        %1517 = vmatprep.subr.mxu0 0.0
        %1518 = vmatpush1.msra.mxu0 0.0
        %1519 = vmatprep.subr.mxu0 0.0
        %1520 = vmatpush1.msra.mxu0 0.0
        %1521 = vmatprep.subr.mxu0 0.0
        %1522 = vmatpush1.msra.mxu0 0.0
        %1523 = vmatprep.subr.mxu0 0.0
        %1524 = vmatpush1.msra.mxu0 0.0
        %1525 = vmatprep.subr.mxu0 0.0
        %1526 = vmatpush1.msra.mxu0 0.0
        %1527 = vmatprep.subr.mxu0 0.0
        %1528 = vmatpush1.msra.mxu0 0.0
        %1529 = vmatprep.subr.mxu0 0.0
        %1530 = vmatpush1.msra.mxu0 0.0
        %1531 = vmatprep.subr.mxu0 0.0
        %1532 = vmatpush1.msra.mxu0 0.0
        %1533 = vmatprep.subr.mxu0 0.0
        %1534 = vmatpush1.msra.mxu0 0.0
        %1535 = vmatprep.subr.mxu0 0.0
        %1536 = vmatpush1.msra.mxu0 0.0
        %1537 = vmatprep.mubr.f32.mxu0 0.0
        %1538 = vmatmul.mubr.f32.gmra.mrb[0].mxu0 %v1471
        %v1539 = vpop.f32.mrb[0].mxu0
        %v1540 = vadd.f32 0.0, %v1539
        %v1541 = vpop.f32.mrb[0].mxu0
        %1542 = vdwg.mxu0
        %1544 = vrot.lane.b32.xlu0 %v1540, 8
        %v1545 = vpop.permute.xlu0 %1544
        %v1547 = vsel %vm611, %v1461, %v1545
        %v1549 = vsel %vm945, %v1547, 0
        %1551 = vmatprep.subr.mxu0 0.0
        %1552 = vmatpush1.msra.mxu0 %v1042
        %1553 = vmatprep.subr.mxu0 0.0
        %1554 = vmatpush1.msra.mxu0 %v1043
        %1555 = vmatprep.subr.mxu0 0.0
        %1556 = vmatpush1.msra.mxu0 0.0
        %1557 = vmatprep.subr.mxu0 0.0
        %1558 = vmatpush1.msra.mxu0 0.0
        %1559 = vmatprep.subr.mxu0 0.0
        %1560 = vmatpush1.msra.mxu0 0.0
        %1561 = vmatprep.subr.mxu0 0.0
        %1562 = vmatpush1.msra.mxu0 0.0
        %1563 = vmatprep.subr.mxu0 0.0
        %1564 = vmatpush1.msra.mxu0 0.0
        %1565 = vmatprep.subr.mxu0 0.0
        %1566 = vmatpush1.msra.mxu0 0.0
        %1567 = vmatprep.subr.mxu0 0.0
        %1568 = vmatpush1.msra.mxu0 0.0
        %1569 = vmatprep.subr.mxu0 0.0
        %1570 = vmatpush1.msra.mxu0 0.0
        %1571 = vmatprep.subr.mxu0 0.0
        %1572 = vmatpush1.msra.mxu0 0.0
        %1573 = vmatprep.subr.mxu0 0.0
        %1574 = vmatpush1.msra.mxu0 0.0
        %1575 = vmatprep.subr.mxu0 0.0
        %1576 = vmatpush1.msra.mxu0 0.0
        %1577 = vmatprep.subr.mxu0 0.0
        %1578 = vmatpush1.msra.mxu0 0.0
        %1579 = vmatprep.subr.mxu0 0.0
        %1580 = vmatpush1.msra.mxu0 0.0
        %1581 = vmatprep.subr.mxu0 0.0
        %1582 = vmatpush1.msra.mxu0 0.0
        %1583 = vmatprep.subr.mxu0 0.0
        %1584 = vmatpush1.msra.mxu0 0.0
        %1585 = vmatprep.subr.mxu0 0.0
        %1586 = vmatpush1.msra.mxu0 0.0
        %1587 = vmatprep.subr.mxu0 0.0
        %1588 = vmatpush1.msra.mxu0 0.0
        %1589 = vmatprep.subr.mxu0 0.0
        %1590 = vmatpush1.msra.mxu0 0.0
        %1591 = vmatprep.subr.mxu0 0.0
        %1592 = vmatpush1.msra.mxu0 0.0
        %1593 = vmatprep.subr.mxu0 0.0
        %1594 = vmatpush1.msra.mxu0 0.0
        %1595 = vmatprep.subr.mxu0 0.0
        %1596 = vmatpush1.msra.mxu0 0.0
        %1597 = vmatprep.subr.mxu0 0.0
        %1598 = vmatpush1.msra.mxu0 0.0
        %1599 = vmatprep.subr.mxu0 0.0
        %1600 = vmatpush1.msra.mxu0 0.0
        %1601 = vmatprep.subr.mxu0 0.0
        %1602 = vmatpush1.msra.mxu0 0.0
        %1603 = vmatprep.subr.mxu0 0.0
        %1604 = vmatpush1.msra.mxu0 0.0
        %1605 = vmatprep.subr.mxu0 0.0
        %1606 = vmatpush1.msra.mxu0 0.0
        %1607 = vmatprep.subr.mxu0 0.0
        %1608 = vmatpush1.msra.mxu0 0.0
        %1609 = vmatprep.subr.mxu0 0.0
        %1610 = vmatpush1.msra.mxu0 0.0
        %1611 = vmatprep.subr.mxu0 0.0
        %1612 = vmatpush1.msra.mxu0 0.0
        %1613 = vmatprep.subr.mxu0 0.0
        %1614 = vmatpush1.msra.mxu0 0.0
        %1615 = vmatprep.mubr.f32.mxu0 0.0
        %1616 = vmatmul.mubr.f32.gmra.mrb[0].mxu0 %v1549
        %v1617 = vpop.f32.mrb[0].mxu0
        %v1618 = vadd.f32 %v1032, %v1617
        %v1619 = vpop.f32.mrb[0].mxu0
        %1620 = vdwg.mxu0
        %v1621 = vsel %vm532, %v1618, 0.0
        %1622 = vadd.xlane.f32.xlu0 %v1621
        %v1623 = vpop.xlane.xlu0 %1622
        %v1624 = vmul.f32 %v1623, %v1022
        %v1625 = vsub.f32 %v1618, %v1624
        %v1626 = vmul.f32 %v1625, %v1625
        %v1627 = vsel %vm532, %v1626, 0.0
        %1628 = vadd.xlane.f32.xlu0 %v1627
        %v1629 = vpop.xlane.xlu0 %1628
        %v1630 = vmul.f32 %v1629, %v1022
        %v1631 = vadd.f32 %v1630, 1e-05
        %v1632 = vrsqrt.pop %v1631
        %v1633 = vmul.f32 %v1625, %v1632
        %v1634 = vld [vmem:[%s9] sm:$0xff]
        %v1635 = vld [vmem:[%s9 + $0x8] sm:$0xff]
        %v1636 = vld [vmem:[%s9 + $0x10] sm:$0xff]
        %v1637 = vld [vmem:[%s9 + $0x18] sm:$0xff]
        %v1639 = vsel %vm532, %v1633, 0
        %1641 = vmatprep.subr.mxu0 0.0
        %1642 = vmatpush1.msra.mxu0 %v1634
        %1643 = vmatprep.subr.mxu0 0.0
        %1644 = vmatpush1.msra.mxu0 %v1635
        %1645 = vmatprep.subr.mxu0 0.0
        %1646 = vmatpush1.msra.mxu0 %v1636
        %1647 = vmatprep.subr.mxu0 0.0
        %1648 = vmatpush1.msra.mxu0 %v1637
        %1649 = vmatprep.subr.mxu0 0.0
        %1650 = vmatpush1.msra.mxu0 0.0
        %1651 = vmatprep.subr.mxu0 0.0
        %1652 = vmatpush1.msra.mxu0 0.0
        %1653 = vmatprep.subr.mxu0 0.0
        %1654 = vmatpush1.msra.mxu0 0.0
        %1655 = vmatprep.subr.mxu0 0.0
        %1656 = vmatpush1.msra.mxu0 0.0
        %1657 = vmatprep.subr.mxu0 0.0
        %1658 = vmatpush1.msra.mxu0 0.0
        %1659 = vmatprep.subr.mxu0 0.0
        %1660 = vmatpush1.msra.mxu0 0.0
        %1661 = vmatprep.subr.mxu0 0.0
        %1662 = vmatpush1.msra.mxu0 0.0
        %1663 = vmatprep.subr.mxu0 0.0
        %1664 = vmatpush1.msra.mxu0 0.0
        %1665 = vmatprep.subr.mxu0 0.0
        %1666 = vmatpush1.msra.mxu0 0.0
        %1667 = vmatprep.subr.mxu0 0.0
        %1668 = vmatpush1.msra.mxu0 0.0
        %1669 = vmatprep.subr.mxu0 0.0
        %1670 = vmatpush1.msra.mxu0 0.0
        %1671 = vmatprep.subr.mxu0 0.0
        %1672 = vmatpush1.msra.mxu0 0.0
        %1673 = vmatprep.subr.mxu0 0.0
        %1674 = vmatpush1.msra.mxu0 0.0
        %1675 = vmatprep.subr.mxu0 0.0
        %1676 = vmatpush1.msra.mxu0 0.0
        %1677 = vmatprep.subr.mxu0 0.0
        %1678 = vmatpush1.msra.mxu0 0.0
        %1679 = vmatprep.subr.mxu0 0.0
        %1680 = vmatpush1.msra.mxu0 0.0
        %1681 = vmatprep.subr.mxu0 0.0
        %1682 = vmatpush1.msra.mxu0 0.0
        %1683 = vmatprep.subr.mxu0 0.0
        %1684 = vmatpush1.msra.mxu0 0.0
        %1685 = vmatprep.subr.mxu0 0.0
        %1686 = vmatpush1.msra.mxu0 0.0
        %1687 = vmatprep.subr.mxu0 0.0
        %1688 = vmatpush1.msra.mxu0 0.0
        %1689 = vmatprep.subr.mxu0 0.0
        %1690 = vmatpush1.msra.mxu0 0.0
        %1691 = vmatprep.subr.mxu0 0.0
        %1692 = vmatpush1.msra.mxu0 0.0
        %1693 = vmatprep.subr.mxu0 0.0
        %1694 = vmatpush1.msra.mxu0 0.0
        %1695 = vmatprep.subr.mxu0 0.0
        %1696 = vmatpush1.msra.mxu0 0.0
        %1697 = vmatprep.subr.mxu0 0.0
        %1698 = vmatpush1.msra.mxu0 0.0
        %1699 = vmatprep.subr.mxu0 0.0
        %1700 = vmatpush1.msra.mxu0 0.0
        %1701 = vmatprep.subr.mxu0 0.0
        %1702 = vmatpush1.msra.mxu0 0.0
        %1703 = vmatprep.subr.mxu0 0.0
        %1704 = vmatpush1.msra.mxu0 0.0
        %1705 = vmatprep.mubr.f32.mxu0 0.0
        %1706 = vmatmul.mubr.f32.gmra.mrb[0].mxu0 %v1639
        %v1707 = vpop.f32.mrb[0].mxu0
        %v1708 = vadd.f32 0.0, %v1707
        %v1709 = vpop.f32.mrb[0].mxu0
        %1710 = vdwg.mxu0
        %v1711 = vmax.f32 %v1708, 0.0
        %v1712 = vld [vmem:[%s10] sm:$0xff]
        %v1713 = vld [vmem:[%s10 + $0x8] sm:$0xff]
        %v1714 = vld [vmem:[%s10 + $0x10] sm:$0xff]
        %v1715 = vld [vmem:[%s10 + $0x18] sm:$0xff]
        %v1716 = vld [vmem:[%s10 + $0x20] sm:$0xff]
        %v1717 = vld [vmem:[%s10 + $0x28] sm:$0xff]
        %v1718 = vld [vmem:[%s10 + $0x30] sm:$0xff]
        %v1719 = vld [vmem:[%s10 + $0x38] sm:$0xff]
        %vm1720 = vcmask 523264
        %v1722 = vsel %vm1720, %v1711, 0
        %1724 = vmatprep.subr.mxu0 0.0
        %1725 = vmatpush1.msra.mxu0 %v1712
        %1726 = vmatprep.subr.mxu0 0.0
        %1727 = vmatpush1.msra.mxu0 %v1713
        %1728 = vmatprep.subr.mxu0 0.0
        %1729 = vmatpush1.msra.mxu0 %v1714
        %1730 = vmatprep.subr.mxu0 0.0
        %1731 = vmatpush1.msra.mxu0 %v1715
        %1732 = vmatprep.subr.mxu0 0.0
        %1733 = vmatpush1.msra.mxu0 %v1716
        %1734 = vmatprep.subr.mxu0 0.0
        %1735 = vmatpush1.msra.mxu0 %v1717
        %1736 = vmatprep.subr.mxu0 0.0
        %1737 = vmatpush1.msra.mxu0 %v1718
        %1738 = vmatprep.subr.mxu0 0.0
        %1739 = vmatpush1.msra.mxu0 %v1719
        %1740 = vmatprep.subr.mxu0 0.0
        %1741 = vmatpush1.msra.mxu0 0.0
        %1742 = vmatprep.subr.mxu0 0.0
        %1743 = vmatpush1.msra.mxu0 0.0
        %1744 = vmatprep.subr.mxu0 0.0
        %1745 = vmatpush1.msra.mxu0 0.0
        %1746 = vmatprep.subr.mxu0 0.0
        %1747 = vmatpush1.msra.mxu0 0.0
        %1748 = vmatprep.subr.mxu0 0.0
        %1749 = vmatpush1.msra.mxu0 0.0
        %1750 = vmatprep.subr.mxu0 0.0
        %1751 = vmatpush1.msra.mxu0 0.0
        %1752 = vmatprep.subr.mxu0 0.0
        %1753 = vmatpush1.msra.mxu0 0.0
        %1754 = vmatprep.subr.mxu0 0.0
        %1755 = vmatpush1.msra.mxu0 0.0
        %1756 = vmatprep.subr.mxu0 0.0
        %1757 = vmatpush1.msra.mxu0 0.0
        %1758 = vmatprep.subr.mxu0 0.0
        %1759 = vmatpush1.msra.mxu0 0.0
        %1760 = vmatprep.subr.mxu0 0.0
        %1761 = vmatpush1.msra.mxu0 0.0
        %1762 = vmatprep.subr.mxu0 0.0
        %1763 = vmatpush1.msra.mxu0 0.0
        %1764 = vmatprep.subr.mxu0 0.0
        %1765 = vmatpush1.msra.mxu0 0.0
        %1766 = vmatprep.subr.mxu0 0.0
        %1767 = vmatpush1.msra.mxu0 0.0
        %1768 = vmatprep.subr.mxu0 0.0
        %1769 = vmatpush1.msra.mxu0 0.0
        %1770 = vmatprep.subr.mxu0 0.0
        %1771 = vmatpush1.msra.mxu0 0.0
        %1772 = vmatprep.subr.mxu0 0.0
        %1773 = vmatpush1.msra.mxu0 0.0
        %1774 = vmatprep.subr.mxu0 0.0
        %1775 = vmatpush1.msra.mxu0 0.0
        %1776 = vmatprep.subr.mxu0 0.0
        %1777 = vmatpush1.msra.mxu0 0.0
        %1778 = vmatprep.subr.mxu0 0.0
        %1779 = vmatpush1.msra.mxu0 0.0
        %1780 = vmatprep.subr.mxu0 0.0
        %1781 = vmatpush1.msra.mxu0 0.0
        %1782 = vmatprep.subr.mxu0 0.0
        %1783 = vmatpush1.msra.mxu0 0.0
        %1784 = vmatprep.subr.mxu0 0.0
        %1785 = vmatpush1.msra.mxu0 0.0
        %1786 = vmatprep.subr.mxu0 0.0
        %1787 = vmatpush1.msra.mxu0 0.0
        %1788 = vmatprep.mubr.f32.mxu0 0.0
        %1789 = vmatmul.mubr.f32.gmra.mrb[0].mxu0 %v1722
        %v1790 = vpop.f32.mrb[0].mxu0
        %v1791 = vadd.f32 %v1633, %v1790
        %v1792 = vpop.f32.mrb[0].mxu0
        %1793 = vdwg.mxu0
        %v1794 = vsel %vm532, %v1791, 0.0
        %1795 = vadd.xlane.f32.xlu0 %v1794
        %v1796 = vpop.xlane.xlu0 %1795
        %v1797 = vmul.f32 %v1796, %v1022
        %v1798 = vsub.f32 %v1791, %v1797
        %v1799 = vmul.f32 %v1798, %v1798
        %v1800 = vsel %vm532, %v1799, 0.0
        %1801 = vadd.xlane.f32.xlu0 %v1800
        %v1802 = vpop.xlane.xlu0 %1801
        %v1803 = vmul.f32 %v1802, %v1022
        %v1804 = vadd.f32 %v1803, 1e-05
        %v1805 = vrsqrt.pop %v1804
        %v1806 = vmul.f32 %v1798, %v1805
        %1807 = vst.msk [vmem:[%s516] sm:$0xff] %vm532, %v1806
        %s1808 = sand.u32 %s291, 1
        %s1809 = scalar_lea.sflag [#allocation4], %s1808
        %s1810 = sand.u32 %s291, 1
        %s1811 = smul.addr %s1810, 8
        %s1812 = scalar_lea.vmem [#allocation11], %s1811
        // Predicated region
        $region85: #{tpu_custom_call.1} parent=63 // pred_check
          %p1813 = pneg %p301
        $region86: #{tpu_custom_call.1} parent=63 // pred_check_branch
          %1815 = sbr.rel (%p1813) target = $region88
        $region87: #{tpu_custom_call.1} parent=63 // pred_region
          %s1817 = ssub.s32 128, 128
          %1818 = vsyncadd %s1809, %s1817
          %s1819 = smul.addr %s32, 128
          %s1820 = scalar_lea.hbm %s11, %s1819
          %s1822 = sshll.u32 %s1812, 4
          %s1823 = int_to_ptr.vmem [resolvable:$true] %s1822
          %1825 = dma.vmem_to_hbm [thread:$0]  %s1823, 128, %s1820, %s1809
        $region88: #{tpu_custom_call.1} parent=63 // pred_fallthru
          _
      $region64: #{tpu_custom_call.1} parent=5 // pred_fallthru
        _
      %p1826 = scmp.le.s32.totalorder 2, %s27
      // Predicated region
      $region89: #{tpu_custom_call.1} parent=5 // pred_check
        %p1827 = pneg %p1826
      $region90: #{tpu_custom_call.1} parent=5 // pred_check_branch
        %1829 = sbr.rel (%p1827) target = $region92
      $region91: #{tpu_custom_call.1} parent=5 // pred_region
        %s1830 = ssub.s32 %s27, 2
        // Predicated region
        $region93: #{tpu_custom_call.1} parent=91 // pred_check
          %p1831 = pneg %p307
        $region94: #{tpu_custom_call.1} parent=91 // pred_check_branch
          %1833 = sbr.rel (%p1831) target = $region96
        $region95: #{tpu_custom_call.1} parent=91 // pred_region
          %s1834 = sand.u32 %s292, 1
          %s1835 = scalar_lea.sflag [#allocation4], %s1834
          %s1836 = sand.u32 %s292, 1
          %s1837 = smul.addr %s1836, 8
          %s1838 = scalar_lea.vmem [#allocation11], %s1837
          %1839 = dma.done %s1835, 128
        $region96: #{tpu_custom_call.1} parent=91 // pred_fallthru
          _
      $region92: #{tpu_custom_call.1} parent=5 // pred_fallthru
        _
    $region6: #{tpu_custom_call.1} parent=1 // loop_footer
      %s31 = sadd.s32 1, %s27
    $region7: #{tpu_custom_call.1} parent=1 // loop_footer_branch
      %26 = sbr.rel target = $region3
    $region8: #{tpu_custom_call.1} parent=1 // loop_exit
      _
    %1840 = vsyncpa [#allocation3], 1
    %s1841 = scalar_lea.sflag [#allocation3], 1
    %1842 = vsyncpa %s1841, 1
    %1843 = vsyncpa [#allocation6], 1
    %s1844 = scalar_lea.sflag [#allocation6], 1
    %1845 = vsyncpa %s1844, 1
    %1846 = vsyncpa [#allocation9], 1
    %1847 = vsyncpa [#allocation4], 1
    %s1848 = scalar_lea.sflag [#allocation4], 1
    %1849 = vsyncpa %s1848, 1

</llo_original>
